<compile_context>
chip_gen: v7x
topology: tpu7x:2x2x1
jax: 0.10.0
libtpu: 0.0.40
codegen_flags: <defaults>
</compile_context>

<pallas_src>
import functools

import jax
import jax.numpy as jnp
from jax.experimental import pallas as pl
from jax.experimental.pallas import tpu as pltpu

LANE = 128
ROW_BLOCK = 512                      # row tile for large graphs
XW_RESIDENT_BYTES = 8 * 1024 * 1024  # keep XW resident if <= 8 MiB (x2 buffers worst case)
VMEM_LIMIT_BYTES = 40 * 1024 * 1024  # explicit scoped-VMEM limit (safe on v5e/v6e/v7x)


def _round_up(x, m):
    return ((x + m - 1) // m) * m


def _choose_tiles(n):
    """Return (n_pad, tm_row, tk): padded node count, row tile, reduction tile."""
    if n <= ROW_BLOCK:
        n_pad = _round_up(n, LANE)
        return n_pad, n_pad, n_pad            # single block on each axis
    n_pad = _round_up(n, ROW_BLOCK)
    tm_row = ROW_BLOCK
    tk = ROW_BLOCK
    for cand in (2048, 1024):                 # biggest reduction tile that divides n_pad
        if n_pad % cand == 0:
            tk = cand
            break
    return n_pad, tm_row, tk


# ---------------------------------------------------------------------------
# Kernel 1: XW = diag(d^-1/2) @ (X @ W)   (row-tiled, computed once per layer)
# ---------------------------------------------------------------------------
def _xw_kernel(x_ref, w_ref, d_ref, o_ref):
    xw = jnp.dot(x_ref[...], w_ref[...], preferred_element_type=jnp.float32)
    o_ref[...] = (xw * d_ref[...]).astype(o_ref.dtype)


def compute_xw(x_bf16, w_bf16, d_row, *, tm):
    """[n_pad, f_in_pad]bf16 @ [f_in_pad, f_pad]bf16, rows scaled by d^-1/2 -> bf16."""
    n_pad, f_in = x_bf16.shape
    f_pad = w_bf16.shape[1]
    return pl.pallas_call(
        _xw_kernel,
        out_shape=jax.ShapeDtypeStruct((n_pad, f_pad), jnp.bfloat16),
        grid=(n_pad // tm,),
        in_specs=[
            pl.BlockSpec((tm, f_in), lambda i: (i, 0)),
            pl.BlockSpec((f_in, f_pad), lambda i: (0, 0)),
            pl.BlockSpec((tm, 1), lambda i: (i, 0)),
        ],
        out_specs=pl.BlockSpec((tm, f_pad), lambda i: (i, 0)),
        compiler_params=pltpu.CompilerParams(
            dimension_semantics=("parallel",),
            vmem_limit_bytes=VMEM_LIMIT_BYTES),
    )(x_bf16, w_bf16, d_row)


# ---------------------------------------------------------------------------
# Kernel 2: H = diag(d^-1/2) @ (A+I) @ XW + b  with fused relu / log_softmax
# ---------------------------------------------------------------------------
def _aggregate_kernel(a_ref, xw_ref, b_ref, dr_ref, o_ref, *scratch, tk,
                      xw_resident, apply_relu, apply_log_softmax, valid_fout):
    acc_ref = scratch[0] if scratch else o_ref   # f32 out -> accumulate in place
    k = pl.program_id(1)

    if xw_resident:
        # XW lives fully in VMEM (constant index_map); slice out this reduction chunk.
        off = pl.multiple_of(k * tk, tk)
        xw_tile = xw_ref[pl.ds(off, tk), :]
    else:
        xw_tile = xw_ref[...]

    # int8 (A+I) tile -> bf16 (small integers are exact), MXU matmul, f32 accumulate.
    a_tile = a_ref[...].astype(jnp.bfloat16)
    prod = jnp.dot(a_tile, xw_tile, preferred_element_type=jnp.float32)

    @pl.when(k == 0)
    def _():
        acc_ref[...] = prod.astype(acc_ref.dtype)      # no zero-fill pass

    @pl.when(k != 0)
    def _():
        acc_ref[...] += prod.astype(acc_ref.dtype)

    @pl.when(k == pl.num_programs(1) - 1)
    def _():
        # left D^-1/2 scale + bias only on the finalize step
        h = acc_ref[...].astype(jnp.float32) * dr_ref[...] + b_ref[...]
        if apply_relu:
            h = jnp.maximum(h, 0.0)
        if apply_log_softmax:
            f_pad = h.shape[-1]
            if valid_fout < f_pad:
                # padded lanes must not contribute to the log-sum-exp
                lane = jax.lax.broadcasted_iota(jnp.int32, h.shape, 1)
                h = jnp.where(lane < valid_fout, h, -jnp.inf)
            m = jnp.max(h, axis=1, keepdims=True)
            lse = m + jnp.log(jnp.sum(jnp.exp(h - m), axis=1, keepdims=True))
            h = h - lse
        o_ref[...] = h.astype(o_ref.dtype)


def gcn_aggregate(a_int8, xw, b_pad, d_row, *, tm_row, tk, out_dtype,
                  apply_relu, apply_log_softmax, valid_fout):
    n_pad = a_int8.shape[0]
    f_pad = xw.shape[1]

    xw_resident = (n_pad * f_pad * 2) <= XW_RESIDENT_BYTES
    if xw_resident:
        xw_spec = pl.BlockSpec((n_pad, f_pad), lambda i, k: (0, 0))   # fetched once
    else:
        xw_spec = pl.BlockSpec((tk, f_pad), lambda i, k: (k, 0))

    # bf16 hidden output needs an f32 scratch accumulator; the f32 final layer
    # accumulates directly into the (k-resident) output block.
    need_scratch = jnp.dtype(out_dtype) != jnp.dtype(jnp.float32)
    scratch_shapes = [pltpu.VMEM((tm_row, f_pad), jnp.float32)] if need_scratch else []

    kernel = functools.partial(
        _aggregate_kernel, tk=tk, xw_resident=xw_resident,
        apply_relu=apply_relu, apply_log_softmax=apply_log_softmax,
        valid_fout=valid_fout)

    return pl.pallas_call(
        kernel,
        out_shape=jax.ShapeDtypeStruct((n_pad, f_pad), out_dtype),
        grid_spec=pltpu.PrefetchScalarGridSpec(
            num_scalar_prefetch=0,
            grid=(n_pad // tm_row, n_pad // tk),       # (row blocks, reduction blocks)
            in_specs=[
                pl.BlockSpec((tm_row, tk), lambda i, k: (i, k)),   # A+I tile (int8)
                xw_spec,                                           # XW (resident or tiled)
                pl.BlockSpec((1, f_pad), lambda i, k: (0, 0)),     # bias
                pl.BlockSpec((tm_row, 1), lambda i, k: (i, 0)),    # d^-1/2 rows
            ],
            out_specs=pl.BlockSpec((tm_row, f_pad), lambda i, k: (i, 0)),
            scratch_shapes=scratch_shapes),
        compiler_params=pltpu.CompilerParams(
            dimension_semantics=("parallel", "arbitrary"),
            vmem_limit_bytes=VMEM_LIMIT_BYTES),
    )(a_int8, xw, b_pad, d_row)


# ---------------------------------------------------------------------------
# Layer wrapper
# ---------------------------------------------------------------------------
def gcn_layer(a_int8, x_bf16, d_row, w, b, *, tm_row, tk, out_dtype,
              apply_relu=False, apply_log_softmax=False):
    """One GCNConv layer on padded operands.

    a_int8 : [n_pad, n_pad] int8  (A + I), zero-padded
    x_bf16 : [n_pad, f_in_pad] bf16 node features (padded rows/lanes zero)
    d_row  : [n_pad, 1] f32 d^-1/2 (zero on padded rows)
    w, b   : unpadded parameters [f_in, f_out], [1, f_out]
    """
    f_in_x = x_bf16.shape[1]
    f_in_w, f_out = w.shape
    f_pad = _round_up(f_out, LANE)
    # Pad W rows to x's lane-padded feature dim and W/b cols to a 128 multiple.
    w_pad = (jnp.zeros((f_in_x, f_pad), jnp.float32)
             .at[:f_in_w, :f_out].set(w).astype(jnp.bfloat16))
    b_pad = jnp.zeros((1, f_pad), jnp.float32).at[0, :f_out].set(b.reshape(-1))

    xw = compute_xw(x_bf16, w_pad, d_row, tm=tm_row)   # [n_pad, f_pad] bf16, once
    return gcn_aggregate(a_int8, xw, b_pad, d_row, tm_row=tm_row, tk=tk,
                         out_dtype=out_dtype, apply_relu=apply_relu,
                         apply_log_softmax=apply_log_softmax, valid_fout=f_out)


# ---------------------------------------------------------------------------
# Graph preprocessing (plain JAX). For static graphs compute this once & reuse.
# ---------------------------------------------------------------------------
def preprocess_graph(edge_index, num_nodes, n_pad):
    """Return (A+I as padded int8, d^-1/2 as [n_pad,1] f32).

    Matches PyG gcn_norm defaults: duplicate edges sum, self-loops added only
    where missing.  Edge multiplicities are assumed < 128 (int8).
    """
    src = edge_index[0]
    dst = edge_index[1]
    a = jnp.zeros((n_pad, n_pad), jnp.float32)
    a = a.at[dst, src].add(1.0)                        # message flows src -> dst
    diag = jnp.diagonal(a)[:num_nodes]
    idx = jnp.arange(num_nodes)
    a = a.at[idx, idx].add(jnp.where(diag == 0.0, 1.0, 0.0))
    deg = jnp.sum(a, axis=1)                           # padded rows have deg 0
    d_inv_sqrt = jnp.where(deg > 0, jax.lax.rsqrt(deg), 0.0)
    return a.astype(jnp.int8), d_inv_sqrt.reshape(n_pad, 1).astype(jnp.float32)


def init_gcn_params(key, input_dim, hidden_dim, output_dim):
    """Glorot-uniform weights, zero biases (matches GCNConv init scheme)."""
    k1, k2 = jax.random.split(key)

    def glorot(k, fan_in, fan_out):
        limit = (6.0 / (fan_in + fan_out)) ** 0.5
        return jax.random.uniform(k, (fan_in, fan_out), jnp.float32, -limit, limit)

    return {
        "w1": glorot(k1, input_dim, hidden_dim),
        "b1": jnp.zeros((1, hidden_dim), jnp.float32),
        "w2": glorot(k2, hidden_dim, output_dim),
        "b2": jnp.zeros((1, output_dim), jnp.float32),
    }


def gcn_forward(params, x, edge_index):
    n, f_in = x.shape
    out_dim = params["w2"].shape[1]
    n_pad, tm_row, tk = _choose_tiles(n)

    a_int8, d_row = preprocess_graph(edge_index, n, n_pad)

    f_in_pad = _round_up(f_in, LANE)
    x_pad = (jnp.zeros((n_pad, f_in_pad), jnp.float32)
             .at[:n, :f_in].set(x).astype(jnp.bfloat16))

    # conv1 + relu (fused epilogue); hidden H kept in bf16
    h = gcn_layer(a_int8, x_pad, d_row, params["w1"], params["b1"],
                  tm_row=tm_row, tk=tk, out_dtype=jnp.bfloat16, apply_relu=True)
    # F.dropout(x, training=self.training): identity in eval / inference mode.
    # TODO(synk): stateful PRNG dropout (pltpu.prng_random_bits) if training parity needed.
    # conv2 + log_softmax(dim=1) (fused epilogue, padded lanes masked to -inf)
    out = gcn_layer(a_int8, h, d_row, params["w2"], params["b2"],
                    tm_row=tm_row, tk=tk, out_dtype=jnp.float32,
                    apply_log_softmax=True)
    return out[:n, :out_dim]


# ---------------------------------------------------------------------------
# Pure-JAX reference (f32) for the correctness check
# ---------------------------------------------------------------------------
def gcn_reference(params, x, edge_index):
    n = x.shape[0]
    a = jnp.zeros((n, n), jnp.float32).at[edge_index[1], edge_index[0]].add(1.0)
    diag = jnp.diagonal(a)
    a = a + jnp.diag(jnp.where(diag == 0, 1.0, 0.0))
    deg = jnp.sum(a, axis=1)
    dis = jnp.where(deg > 0, 1.0 / jnp.sqrt(deg), 0.0)
    a_hat = dis[:, None] * a * dis[None, :]
    h = jax.nn.relu(a_hat @ (x @ params["w1"]) + params["b1"])
    logits = a_hat @ (h @ params["w2"]) + params["b2"]
    return jax.nn.log_softmax(logits, axis=1)


if __name__ == "__main__":
    key = jax.random.PRNGKey(0)
    kx, ke1, ke2, kp = jax.random.split(key, 4)

    N, INPUT_DIM, HIDDEN_DIM, OUTPUT_DIM = 16, 16, 32, 8
    NUM_EDGES = 24

    x = jax.random.normal(kx, (N, INPUT_DIM), jnp.float32)
    src = jax.random.randint(ke1, (NUM_EDGES,), 0, N)
    dst = jax.random.randint(ke2, (NUM_EDGES,), 0, N)
    # undirected edge_index [2, 2E]
    edge_index = jnp.stack(
        [jnp.concatenate([src, dst]), jnp.concatenate([dst, src])], axis=0
    ).astype(jnp.int32)

    params = init_gcn_params(kp, INPUT_DIM, HIDDEN_DIM, OUTPUT_DIM)

    out = jax.jit(gcn_forward)(params, x, edge_index)
    out = jax.block_until_ready(out)

    assert out.shape == (N, OUTPUT_DIM)
    # rows of log_softmax should sum (in prob space) to ~1
    assert bool(jnp.all(jnp.abs(jnp.sum(jnp.exp(out), axis=1) - 1.0) < 1e-3))
    # bf16 X / W / H tolerance vs f32 reference (A+I int8 stream itself is exact)
    ref = gcn_reference(params, x, edge_index)
    assert bool(jnp.max(jnp.abs(out - ref)) < 0.15)

    print("KERNEL_OK")
</pallas_src>

<mosaic_0001>
module attributes {stable_mosaic.version = 11 : i64} {
  func.func private @main(%arg0: i32) attributes {dimension_semantics = [#tpu.dimension_semantics<core_parallel>], iteration_bounds = array<i64: 2>, tpu.core_type = #tpu.core_type<sc_scalar_subcore>, window_params = []} {
    return
  }
}

module attributes {stable_mosaic.version = 11 : i64} {
  func.func private @main(%arg0: i32) attributes {dimension_semantics = [#tpu.dimension_semantics<core_parallel>], iteration_bounds = array<i64: 2>, tpu.core_type = #tpu.core_type<sc_scalar_subcore>, window_params = []} {
    return
  }
}

module attributes {stable_mosaic.version = 11 : i64} {
  func.func @_aggregate_kernel(%arg0: i32, %arg1: i32, %arg2: memref<128x128xi8, #tpu.memory_space<vmem>>, %arg3: memref<128x128xbf16, #tpu.memory_space<vmem>>, %arg4: memref<1x128xf32, #tpu.memory_space<vmem>>, %arg5: memref<128x1xf32, #tpu.memory_space<vmem>>, %arg6: memref<128x128xf32, #tpu.memory_space<vmem>>) attributes {dimension_semantics = [#tpu.dimension_semantics<parallel>, #tpu.dimension_semantics<arbitrary>], iteration_bounds = array<i64: 1, 1>, scalar_prefetch = 0 : i64, scratch_operands = 0 : i64, tpu.core_type = #tpu.core_type<tc>, window_params = [{transform_indices = @transform_0, window_bounds = array<i64: 128, 128>}, {pipeline_mode = #tpu.pipeline_mode<synchronous>, transform_indices = @transform_1, window_bounds = array<i64: 128, 128>}, {pipeline_mode = #tpu.pipeline_mode<synchronous>, transform_indices = @transform_2, window_bounds = array<i64: 1, 128>}, {transform_indices = @transform_3, window_bounds = array<i64: 128, 1>}, {transform_indices = @transform_4, window_bounds = array<i64: 128, 128>}]} {
    %c128_i32 = arith.constant 128 : i32
    %0 = arith.muli %arg1, %c128_i32 : i32
    %1 = tpu.assume_multiple %0, 128 : i32
    %2 = arith.index_cast %1 : i32 to index
    %c0 = arith.constant 0 : index
    %3 = vector.load %arg3[%2, %c0] : memref<128x128xbf16, #tpu.memory_space<vmem>>, vector<128x128xbf16>
    %c0_0 = arith.constant 0 : index
    %c0_1 = arith.constant 0 : index
    %4 = vector.load %arg2[%c0_0, %c0_1] : memref<128x128xi8, #tpu.memory_space<vmem>>, vector<128x128xi8>
    %5 = arith.sitofp %4 : vector<128x128xi8> to vector<128x128xbf16>
    %cst = arith.constant dense<0.000000e+00> : vector<128x128xf32>
    %6 = tpu.matmul %5, %3, %cst {dimension_numbers = #tpu.dot_dimension_numbers<[1], [0], [0], [1], [0, 0, 1, 1], [], []>} : vector<128x128xbf16>, vector<128x128xbf16>, vector<128x128xf32> -> vector<128x128xf32>
    %c0_i32 = arith.constant 0 : i32
    %7 = arith.cmpi eq, %arg1, %c0_i32 : i32
    %8 = arith.extui %7 : i1 to i32
    %c0_i32_2 = arith.constant 0 : i32
    %9 = arith.cmpi ne, %8, %c0_i32_2 : i32
    scf.if %9 {
      %c0_7 = arith.constant 0 : index
      %c0_8 = arith.constant 0 : index
      %16 = vector.load %arg6[%c0_7, %c0_8] : memref<128x128xf32, #tpu.memory_space<vmem>>, vector<128x128xf32>
      tpu.vector_store %arg6[%c0_7, %c0_8], %6 {strides = array<i32>} : memref<128x128xf32, #tpu.memory_space<vmem>>, vector<128x128xf32>,
    } else {
    }
    %c0_i32_3 = arith.constant 0 : i32
    %10 = arith.cmpi ne, %arg1, %c0_i32_3 : i32
    %11 = arith.extui %10 : i1 to i32
    %c0_i32_4 = arith.constant 0 : i32
    %12 = arith.cmpi ne, %11, %c0_i32_4 : i32
    scf.if %12 {
      %c0_7 = arith.constant 0 : index
      %c0_8 = arith.constant 0 : index
      %16 = vector.load %arg6[%c0_7, %c0_8] : memref<128x128xf32, #tpu.memory_space<vmem>>, vector<128x128xf32>
      %17 = arith.addf %16, %6 : vector<128x128xf32>
      %c0_9 = arith.constant 0 : index
      %c0_10 = arith.constant 0 : index
      %18 = vector.load %arg6[%c0_9, %c0_10] : memref<128x128xf32, #tpu.memory_space<vmem>>, vector<128x128xf32>
      tpu.vector_store %arg6[%c0_9, %c0_10], %17 {strides = array<i32>} : memref<128x128xf32, #tpu.memory_space<vmem>>, vector<128x128xf32>,
    } else {
    }
    %c0_i32_5 = arith.constant 0 : i32
    %13 = arith.cmpi eq, %arg1, %c0_i32_5 : i32
    %14 = arith.extui %13 : i1 to i32
    %c0_i32_6 = arith.constant 0 : i32
    %15 = arith.cmpi ne, %14, %c0_i32_6 : i32
    scf.if %15 {
      %c0_7 = arith.constant 0 : index
      %c0_8 = arith.constant 0 : index
      %16 = vector.load %arg6[%c0_7, %c0_8] : memref<128x128xf32, #tpu.memory_space<vmem>>, vector<128x128xf32>
      %c0_9 = arith.constant 0 : index
      %c0_10 = arith.constant 0 : index
      %17 = vector.load %arg5[%c0_9, %c0_10] : memref<128x1xf32, #tpu.memory_space<vmem>>, vector<128x1xf32>
      %18 = vector.broadcast %17 : vector<128x1xf32> to vector<128x128xf32>
      %19 = arith.mulf %16, %18 : vector<128x128xf32>
      %c0_11 = arith.constant 0 : index
      %c0_12 = arith.constant 0 : index
      %20 = vector.load %arg4[%c0_11, %c0_12] : memref<1x128xf32, #tpu.memory_space<vmem>>, vector<1x128xf32>
      %21 = vector.broadcast %20 : vector<1x128xf32> to vector<128x128xf32>
      %22 = arith.addf %19, %21 : vector<128x128xf32>
      %23 = tpu.iota {dimensions = array<i32: 1>} : vector<128x128xi32>
      %c8_i32 = arith.constant 8 : i32
      %24 = vector.broadcast %c8_i32 : i32 to vector<128x128xi32>
      %25 = arith.cmpi slt, %23, %24 : vector<128x128xi32>
      %cst_13 = arith.constant 0xFF800000 : f32
      %26 = vector.broadcast %cst_13 : f32 to vector<128x128xf32>
      %27 = arith.select %25, %22, %26 : vector<128x128xi1>, vector<128x128xf32>
      %cst_14 = arith.constant dense<0xFF800000> : vector<128xf32>
      %28 = vector.multi_reduction <maximumf>, %27, %cst_14 [1] : vector<128x128xf32> to vector<128xf32>
      %29 = vector.shape_cast %28 : vector<128xf32> to vector<128x1xf32>
      %30 = vector.broadcast %29 : vector<128x1xf32> to vector<128x128xf32>
      %31 = arith.subf %27, %30 : vector<128x128xf32>
      %32 = math.exp %31 : vector<128x128xf32>
      %cst_15 = arith.constant dense<0.000000e+00> : vector<128xf32>
      %33 = vector.multi_reduction <add>, %32, %cst_15 [1] : vector<128x128xf32> to vector<128xf32>
      %34 = vector.shape_cast %33 : vector<128xf32> to vector<128x1xf32>
      %35 = math.log %34 : vector<128x1xf32>
      %36 = arith.addf %29, %35 : vector<128x1xf32>
      %37 = vector.broadcast %36 : vector<128x1xf32> to vector<128x128xf32>
      %38 = arith.subf %27, %37 : vector<128x128xf32>
      %c0_16 = arith.constant 0 : index
      %c0_17 = arith.constant 0 : index
      %39 = vector.load %arg6[%c0_16, %c0_17] : memref<128x128xf32, #tpu.memory_space<vmem>>, vector<128x128xf32>
      tpu.vector_store %arg6[%c0_16, %c0_17], %38 {strides = array<i32>} : memref<128x128xf32, #tpu.memory_space<vmem>>, vector<128x128xf32>,
    } else {
    }
    return
  }
  func.func @transform_0(%arg0: i32, %arg1: i32) -> (i32, i32) {
    %c0_i32 = arith.constant 0 : i32
    return %arg0, %arg1 : i32, i32
  }
  func.func @transform_1(%arg0: i32, %arg1: i32) -> (i32, i32) {
    %c0_i32 = arith.constant 0 : i32
    %c0_i32_0 = arith.constant 0 : i32
    %c0_i32_1 = arith.constant 0 : i32
    return %c0_i32, %c0_i32_0 : i32, i32
  }
  func.func @transform_2(%arg0: i32, %arg1: i32) -> (i32, i32) {
    %c0_i32 = arith.constant 0 : i32
    %c0_i32_0 = arith.constant 0 : i32
    %c0_i32_1 = arith.constant 0 : i32
    return %c0_i32, %c0_i32_0 : i32, i32
  }
  func.func @transform_3(%arg0: i32, %arg1: i32) -> (i32, i32) {
    %c0_i32 = arith.constant 0 : i32
    %c0_i32_0 = arith.constant 0 : i32
    return %arg0, %c0_i32 : i32, i32
  }
  func.func @transform_4(%arg0: i32, %arg1: i32) -> (i32, i32) {
    %c0_i32 = arith.constant 0 : i32
    %c0_i32_0 = arith.constant 0 : i32
    return %arg0, %c0_i32 : i32, i32
  }
}

module attributes {stable_mosaic.version = 11 : i64} {
  func.func @_xw_kernel(%arg0: i32, %arg1: memref<128x128xbf16, #tpu.memory_space<vmem>>, %arg2: memref<128x128xbf16, #tpu.memory_space<vmem>>, %arg3: memref<128x1xf32, #tpu.memory_space<vmem>>, %arg4: memref<128x128xbf16, #tpu.memory_space<vmem>>) attributes {dimension_semantics = [#tpu.dimension_semantics<parallel>], iteration_bounds = array<i64: 1>, scalar_prefetch = 0 : i64, scratch_operands = 0 : i64, tpu.core_type = #tpu.core_type<tc>, window_params = [{transform_indices = @transform_0, window_bounds = array<i64: 128, 128>}, {pipeline_mode = #tpu.pipeline_mode<synchronous>, transform_indices = @transform_1, window_bounds = array<i64: 128, 128>}, {transform_indices = @transform_2, window_bounds = array<i64: 128, 1>}, {transform_indices = @transform_3, window_bounds = array<i64: 128, 128>}]} {
    %c0 = arith.constant 0 : index
    %c0_0 = arith.constant 0 : index
    %0 = vector.load %arg1[%c0, %c0_0] : memref<128x128xbf16, #tpu.memory_space<vmem>>, vector<128x128xbf16>
    %c0_1 = arith.constant 0 : index
    %c0_2 = arith.constant 0 : index
    %1 = vector.load %arg2[%c0_1, %c0_2] : memref<128x128xbf16, #tpu.memory_space<vmem>>, vector<128x128xbf16>
    %cst = arith.constant dense<0.000000e+00> : vector<128x128xf32>
    %2 = tpu.matmul %0, %1, %cst {dimension_numbers = #tpu.dot_dimension_numbers<[1], [0], [0], [1], [0, 0, 1, 1], [], []>} : vector<128x128xbf16>, vector<128x128xbf16>, vector<128x128xf32> -> vector<128x128xf32>
    %c0_3 = arith.constant 0 : index
    %c0_4 = arith.constant 0 : index
    %3 = vector.load %arg3[%c0_3, %c0_4] : memref<128x1xf32, #tpu.memory_space<vmem>>, vector<128x1xf32>
    %4 = vector.broadcast %3 : vector<128x1xf32> to vector<128x128xf32>
    %5 = arith.mulf %2, %4 : vector<128x128xf32>
    %6 = arith.truncf %5 : vector<128x128xf32> to vector<128x128xbf16>
    %c0_5 = arith.constant 0 : index
    %c0_6 = arith.constant 0 : index
    %7 = vector.load %arg4[%c0_5, %c0_6] : memref<128x128xbf16, #tpu.memory_space<vmem>>, vector<128x128xbf16>
    tpu.vector_store %arg4[%c0_5, %c0_6], %6 {strides = array<i32>} : memref<128x128xbf16, #tpu.memory_space<vmem>>, vector<128x128xbf16>,
    return
  }
  func.func @transform_0(%arg0: i32) -> (i32, i32) {
    %c0_i32 = arith.constant 0 : i32
    %c0_i32_0 = arith.constant 0 : i32
    return %arg0, %c0_i32 : i32, i32
  }
  func.func @transform_1(%arg0: i32) -> (i32, i32) {
    %c0_i32 = arith.constant 0 : i32
    %c0_i32_0 = arith.constant 0 : i32
    %c0_i32_1 = arith.constant 0 : i32
    return %c0_i32, %c0_i32_0 : i32, i32
  }
  func.func @transform_2(%arg0: i32) -> (i32, i32) {
    %c0_i32 = arith.constant 0 : i32
    %c0_i32_0 = arith.constant 0 : i32
    return %arg0, %c0_i32 : i32, i32
  }
  func.func @transform_3(%arg0: i32) -> (i32, i32) {
    %c0_i32 = arith.constant 0 : i32
    %c0_i32_0 = arith.constant 0 : i32
    return %arg0, %c0_i32 : i32, i32
  }
}

module attributes {stable_mosaic.version = 11 : i64} {
  func.func @_aggregate_kernel(%arg0: i32, %arg1: i32, %arg2: memref<128x128xi8, #tpu.memory_space<vmem>>, %arg3: memref<128x128xbf16, #tpu.memory_space<vmem>>, %arg4: memref<1x128xf32, #tpu.memory_space<vmem>>, %arg5: memref<128x1xf32, #tpu.memory_space<vmem>>, %arg6: memref<128x128xbf16, #tpu.memory_space<vmem>>, %arg7: memref<128x128xf32, #tpu.memory_space<vmem>>) attributes {dimension_semantics = [#tpu.dimension_semantics<parallel>, #tpu.dimension_semantics<arbitrary>], iteration_bounds = array<i64: 1, 1>, scalar_prefetch = 0 : i64, scratch_operands = 1 : i64, tpu.core_type = #tpu.core_type<tc>, window_params = [{transform_indices = @transform_0, window_bounds = array<i64: 128, 128>}, {pipeline_mode = #tpu.pipeline_mode<synchronous>, transform_indices = @transform_1, window_bounds = array<i64: 128, 128>}, {pipeline_mode = #tpu.pipeline_mode<synchronous>, transform_indices = @transform_2, window_bounds = array<i64: 1, 128>}, {transform_indices = @transform_3, window_bounds = array<i64: 128, 1>}, {transform_indices = @transform_4, window_bounds = array<i64: 128, 128>}]} {
    %c128_i32 = arith.constant 128 : i32
    %0 = arith.muli %arg1, %c128_i32 : i32
    %1 = tpu.assume_multiple %0, 128 : i32
    %2 = arith.index_cast %1 : i32 to index
    %c0 = arith.constant 0 : index
    %3 = vector.load %arg3[%2, %c0] : memref<128x128xbf16, #tpu.memory_space<vmem>>, vector<128x128xbf16>
    %c0_0 = arith.constant 0 : index
    %c0_1 = arith.constant 0 : index
    %4 = vector.load %arg2[%c0_0, %c0_1] : memref<128x128xi8, #tpu.memory_space<vmem>>, vector<128x128xi8>
    %5 = arith.sitofp %4 : vector<128x128xi8> to vector<128x128xbf16>
    %cst = arith.constant dense<0.000000e+00> : vector<128x128xf32>
    %6 = tpu.matmul %5, %3, %cst {dimension_numbers = #tpu.dot_dimension_numbers<[1], [0], [0], [1], [0, 0, 1, 1], [], []>} : vector<128x128xbf16>, vector<128x128xbf16>, vector<128x128xf32> -> vector<128x128xf32>
    %c0_i32 = arith.constant 0 : i32
    %7 = arith.cmpi eq, %arg1, %c0_i32 : i32
    %8 = arith.extui %7 : i1 to i32
    %c0_i32_2 = arith.constant 0 : i32
    %9 = arith.cmpi ne, %8, %c0_i32_2 : i32
    scf.if %9 {
      %c0_7 = arith.constant 0 : index
      %c0_8 = arith.constant 0 : index
      %16 = vector.load %arg7[%c0_7, %c0_8] : memref<128x128xf32, #tpu.memory_space<vmem>>, vector<128x128xf32>
      tpu.vector_store %arg7[%c0_7, %c0_8], %6 {strides = array<i32>} : memref<128x128xf32, #tpu.memory_space<vmem>>, vector<128x128xf32>,
    } else {
    }
    %c0_i32_3 = arith.constant 0 : i32
    %10 = arith.cmpi ne, %arg1, %c0_i32_3 : i32
    %11 = arith.extui %10 : i1 to i32
    %c0_i32_4 = arith.constant 0 : i32
    %12 = arith.cmpi ne, %11, %c0_i32_4 : i32
    scf.if %12 {
      %c0_7 = arith.constant 0 : index
      %c0_8 = arith.constant 0 : index
      %16 = vector.load %arg7[%c0_7, %c0_8] : memref<128x128xf32, #tpu.memory_space<vmem>>, vector<128x128xf32>
      %17 = arith.addf %16, %6 : vector<128x128xf32>
      %c0_9 = arith.constant 0 : index
      %c0_10 = arith.constant 0 : index
      %18 = vector.load %arg7[%c0_9, %c0_10] : memref<128x128xf32, #tpu.memory_space<vmem>>, vector<128x128xf32>
      tpu.vector_store %arg7[%c0_9, %c0_10], %17 {strides = array<i32>} : memref<128x128xf32, #tpu.memory_space<vmem>>, vector<128x128xf32>,
    } else {
    }
    %c0_i32_5 = arith.constant 0 : i32
    %13 = arith.cmpi eq, %arg1, %c0_i32_5 : i32
    %14 = arith.extui %13 : i1 to i32
    %c0_i32_6 = arith.constant 0 : i32
    %15 = arith.cmpi ne, %14, %c0_i32_6 : i32
    scf.if %15 {
      %c0_7 = arith.constant 0 : index
      %c0_8 = arith.constant 0 : index
      %16 = vector.load %arg7[%c0_7, %c0_8] : memref<128x128xf32, #tpu.memory_space<vmem>>, vector<128x128xf32>
      %c0_9 = arith.constant 0 : index
      %c0_10 = arith.constant 0 : index
      %17 = vector.load %arg5[%c0_9, %c0_10] : memref<128x1xf32, #tpu.memory_space<vmem>>, vector<128x1xf32>
      %18 = vector.broadcast %17 : vector<128x1xf32> to vector<128x128xf32>
      %19 = arith.mulf %16, %18 : vector<128x128xf32>
      %c0_11 = arith.constant 0 : index
      %c0_12 = arith.constant 0 : index
      %20 = vector.load %arg4[%c0_11, %c0_12] : memref<1x128xf32, #tpu.memory_space<vmem>>, vector<1x128xf32>
      %21 = vector.broadcast %20 : vector<1x128xf32> to vector<128x128xf32>
      %22 = arith.addf %19, %21 : vector<128x128xf32>
      %cst_13 = arith.constant 0.000000e+00 : f32
      %23 = vector.broadcast %cst_13 : f32 to vector<128x128xf32>
      %24 = arith.maximumf %22, %23 : vector<128x128xf32>
      %25 = arith.truncf %24 : vector<128x128xf32> to vector<128x128xbf16>
      %c0_14 = arith.constant 0 : index
      %c0_15 = arith.constant 0 : index
      %26 = vector.load %arg6[%c0_14, %c0_15] : memref<128x128xbf16, #tpu.memory_space<vmem>>, vector<128x128xbf16>
      tpu.vector_store %arg6[%c0_14, %c0_15], %25 {strides = array<i32>} : memref<128x128xbf16, #tpu.memory_space<vmem>>, vector<128x128xbf16>,
    } else {
    }
    return
  }
  func.func @transform_0(%arg0: i32, %arg1: i32) -> (i32, i32) {
    %c0_i32 = arith.constant 0 : i32
    return %arg0, %arg1 : i32, i32
  }
  func.func @transform_1(%arg0: i32, %arg1: i32) -> (i32, i32) {
    %c0_i32 = arith.constant 0 : i32
    %c0_i32_0 = arith.constant 0 : i32
    %c0_i32_1 = arith.constant 0 : i32
    return %c0_i32, %c0_i32_0 : i32, i32
  }
  func.func @transform_2(%arg0: i32, %arg1: i32) -> (i32, i32) {
    %c0_i32 = arith.constant 0 : i32
    %c0_i32_0 = arith.constant 0 : i32
    %c0_i32_1 = arith.constant 0 : i32
    return %c0_i32, %c0_i32_0 : i32, i32
  }
  func.func @transform_3(%arg0: i32, %arg1: i32) -> (i32, i32) {
    %c0_i32 = arith.constant 0 : i32
    %c0_i32_0 = arith.constant 0 : i32
    return %arg0, %c0_i32 : i32, i32
  }
  func.func @transform_4(%arg0: i32, %arg1: i32) -> (i32, i32) {
    %c0_i32 = arith.constant 0 : i32
    %c0_i32_0 = arith.constant 0 : i32
    return %arg0, %c0_i32 : i32, i32
  }
}

</mosaic_0001>

<llo_original>
// kernel: gcn_forward.7
$region0: #{gcn_forward.7}
  #allocation0 [shape = 'u32[]', space=smem, size = 0x4, offset = 0x4, fixed_abs, tag = 'smem constant byte address 0x4 - core index']
  #allocation1 [shape = 'u32[144,128]{1,0:T(1,128)}', space=vmem, size = 0x12000, scoped, tag = 'internal scratch']
  %s0 = inlined_call_operand.vmem [shape: s8[128,128], index: 0, kind: input, shape index: {}]
  %s1 = inlined_call_operand.vmem [shape: bf16[128,128], index: 1, kind: input, shape index: {}]
  %s2 = inlined_call_operand.vmem [shape: f32[1,128], index: 2, kind: input, shape index: {}]
  %s3 = inlined_call_operand.vmem [shape: f32[128,1], index: 3, kind: input, shape index: {}]
  %s4 = inlined_call_operand.vmem [shape: f32[128,128], index: 4, kind: output, shape index: {}]
  %s5 = sld [smem:[#allocation0]]
  $region38: #{gcn_forward.7} parent=0
    _
  %s7 = ssub.s32 1, %s5
  %s8 = scalar_select 0, %s7, %s5
  // Predicated region
  $region2: #{gcn_forward.7} parent=0 // pred_check
    _
  $region3: #{gcn_forward.7} parent=0 // pred_check_branch
    %10 = sbr.rel (0) target = $region5
  $region4: #{gcn_forward.7} parent=0 // pred_region
    _
  $region5: #{gcn_forward.7} parent=0 // pred_fallthru
    _
  // Predicated region
  $region6: #{gcn_forward.7} parent=0 // pred_check
    _
  $region7: #{gcn_forward.7} parent=0 // pred_check_branch
    %12 = sbr.rel (0) target = $region9
  $region8: #{gcn_forward.7} parent=0 // pred_region
    _
  $region9: #{gcn_forward.7} parent=0 // pred_fallthru
    _
  // Predicated region
  $region10: #{gcn_forward.7} parent=0 // pred_check
    _
  $region11: #{gcn_forward.7} parent=0 // pred_check_branch
    %14 = sbr.rel (0) target = $region13
  $region12: #{gcn_forward.7} parent=0 // pred_region
    _
  $region13: #{gcn_forward.7} parent=0 // pred_fallthru
    _
  // Predicated region
  $region14: #{gcn_forward.7} parent=0 // pred_check
    _
  $region15: #{gcn_forward.7} parent=0 // pred_check_branch
    %16 = sbr.rel (0) target = $region17
  $region16: #{gcn_forward.7} parent=0 // pred_region
    _
  $region17: #{gcn_forward.7} parent=0 // pred_fallthru
    _
  %s18 = smul.u32 0, 128
  %s19 = sshra.s32 %s18, 3
  %s20 = sand.u32 %s18, 7
  %s21 = smul.addr %s19, 4
  %s22 = scalar_lea.vmem %s1, %s21
  %v23 = vld [vmem:[%s22] sm:$0xf]
  %v24 = vld [vmem:[%s22 + $0x4] sm:$0xf]
  %v25 = vld [vmem:[%s22 + $0x8] sm:$0xf]
  %v26 = vld [vmem:[%s22 + $0xc] sm:$0xf]
  %v27 = vld [vmem:[%s22 + $0x10] sm:$0xf]
  %v28 = vld [vmem:[%s22 + $0x14] sm:$0xf]
  %v29 = vld [vmem:[%s22 + $0x18] sm:$0xf]
  %v30 = vld [vmem:[%s22 + $0x1c] sm:$0xf]
  %v31 = vld [vmem:[%s22 + $0x20] sm:$0xf]
  %v32 = vld [vmem:[%s22 + $0x24] sm:$0xf]
  %v33 = vld [vmem:[%s22 + $0x28] sm:$0xf]
  %v34 = vld [vmem:[%s22 + $0x2c] sm:$0xf]
  %v35 = vld [vmem:[%s22 + $0x30] sm:$0xf]
  %v36 = vld [vmem:[%s22 + $0x34] sm:$0xf]
  %v37 = vld [vmem:[%s22 + $0x38] sm:$0xf]
  %v38 = vld [vmem:[%s22 + $0x3c] sm:$0xf]
  %v39 = vld [vmem:[%s0] sm:$0xff]
  %v40 = vld [vmem:[%s0 + $0x8] sm:$0xff]
  %v41 = vld [vmem:[%s0 + $0x10] sm:$0xff]
  %v42 = vld [vmem:[%s0 + $0x18] sm:$0xff]
  %v43 = vunpack.c.l.s8.bf16 %v39
  %v44 = vunpack.c.h.s8.bf16 %v39
  %v45 = vunpack.c.l.s8.bf16 %v40
  %v46 = vunpack.c.h.s8.bf16 %v40
  %v47 = vunpack.c.l.s8.bf16 %v41
  %v48 = vunpack.c.h.s8.bf16 %v41
  %v49 = vunpack.c.l.s8.bf16 %v42
  %v50 = vunpack.c.h.s8.bf16 %v42
  %v67 = vunpack.c.l.b16 %v23
  %v68 = vunpack.c.l.b16 %v24
  %v69 = vunpack.c.l.b16 %v25
  %v70 = vunpack.c.l.b16 %v26
  %v71 = vunpack.c.l.b16 %v27
  %v72 = vunpack.c.l.b16 %v28
  %v73 = vunpack.c.l.b16 %v29
  %v74 = vunpack.c.l.b16 %v30
  %v75 = vunpack.c.l.b16 %v31
  %v76 = vunpack.c.l.b16 %v32
  %v77 = vunpack.c.l.b16 %v33
  %v78 = vunpack.c.l.b16 %v34
  %v79 = vunpack.c.l.b16 %v35
  %v80 = vunpack.c.l.b16 %v36
  %v81 = vunpack.c.l.b16 %v37
  %v82 = vunpack.c.l.b16 %v38
  %v83 = vpack.c.b16 %v68, %v67
  %v84 = vpack.c.b16 %v70, %v69
  %v85 = vpack.c.b16 %v72, %v71
  %v86 = vpack.c.b16 %v74, %v73
  %v87 = vpack.c.b16 %v76, %v75
  %v88 = vpack.c.b16 %v78, %v77
  %v89 = vpack.c.b16 %v80, %v79
  %v90 = vpack.c.b16 %v82, %v81
  %99 = vmatprep.subr.bf16.mxu0 0
  %100 = vmatpush1.bf16.msra.mxu0 %v83
  %101 = vmatprep.subr.bf16.mxu0 0
  %102 = vmatpush1.bf16.msra.mxu0 %v84
  %103 = vmatprep.subr.bf16.mxu0 0
  %104 = vmatpush1.bf16.msra.mxu0 %v85
  %105 = vmatprep.subr.bf16.mxu0 0
  %106 = vmatpush1.bf16.msra.mxu0 %v86
  %107 = vmatprep.subr.bf16.mxu0 0
  %108 = vmatpush1.bf16.msra.mxu0 %v87
  %109 = vmatprep.subr.bf16.mxu0 0
  %110 = vmatpush1.bf16.msra.mxu0 %v88
  %111 = vmatprep.subr.bf16.mxu0 0
  %112 = vmatpush1.bf16.msra.mxu0 %v89
  %113 = vmatprep.subr.bf16.mxu0 0
  %114 = vmatpush1.bf16.msra.mxu0 %v90
  %115 = vmatprep.subr.bf16.mxu0 0
  %116 = vmatpush1.bf16.msra.mxu0 0
  %117 = vmatprep.subr.bf16.mxu0 0
  %118 = vmatpush1.bf16.msra.mxu0 0
  %119 = vmatprep.subr.bf16.mxu0 0
  %120 = vmatpush1.bf16.msra.mxu0 0
  %121 = vmatprep.subr.bf16.mxu0 0
  %122 = vmatpush1.bf16.msra.mxu0 0
  %123 = vmatprep.subr.bf16.mxu0 0
  %124 = vmatpush1.bf16.msra.mxu0 0
  %125 = vmatprep.subr.bf16.mxu0 0
  %126 = vmatpush1.bf16.msra.mxu0 0
  %127 = vmatprep.subr.bf16.mxu0 0
  %128 = vmatpush1.bf16.msra.mxu0 0
  %129 = vmatprep.subr.bf16.mxu0 0
  %130 = vmatpush1.bf16.msra.mxu0 0
  %131 = vmatprep.mubr.bf16.mxu0 0
  %132 = vmatmul.mubr.bf16.gmra.mrb[0].mxu0 %v43
  %v133 = vpop.f32.mrb[0].mxu0
  %v134 = vadd.f32 0.0, %v133
  %v135 = vpop.f32.mrb[0].mxu0
  %v136 = vpop.f32.mrb[0].mxu0
  %v137 = vadd.f32 0.0, %v136
  %v138 = vpop.f32.mrb[0].mxu0
  %139 = vmatprep.mubr.bf16.mxu0 0
  %140 = vmatmul.mubr.bf16.gmra.mrb[0].mxu0 %v44
  %v141 = vpop.f32.mrb[0].mxu0
  %v142 = vadd.f32 0.0, %v141
  %v143 = vpop.f32.mrb[0].mxu0
  %v144 = vpop.f32.mrb[0].mxu0
  %v145 = vadd.f32 0.0, %v144
  %v146 = vpop.f32.mrb[0].mxu0
  %147 = vmatprep.mubr.bf16.mxu0 0
  %148 = vmatmul.mubr.bf16.gmra.mrb[0].mxu0 %v45
  %v149 = vpop.f32.mrb[0].mxu0
  %v150 = vadd.f32 0.0, %v149
  %v151 = vpop.f32.mrb[0].mxu0
  %v152 = vpop.f32.mrb[0].mxu0
  %v153 = vadd.f32 0.0, %v152
  %v154 = vpop.f32.mrb[0].mxu0
  %155 = vmatprep.mubr.bf16.mxu0 0
  %156 = vmatmul.mubr.bf16.gmra.mrb[0].mxu0 %v46
  %v157 = vpop.f32.mrb[0].mxu0
  %v158 = vadd.f32 0.0, %v157
  %v159 = vpop.f32.mrb[0].mxu0
  %v160 = vpop.f32.mrb[0].mxu0
  %v161 = vadd.f32 0.0, %v160
  %v162 = vpop.f32.mrb[0].mxu0
  %163 = vmatprep.mubr.bf16.mxu0 0
  %164 = vmatmul.mubr.bf16.gmra.mrb[0].mxu0 %v47
  %v165 = vpop.f32.mrb[0].mxu0
  %v166 = vadd.f32 0.0, %v165
  %v167 = vpop.f32.mrb[0].mxu0
  %v168 = vpop.f32.mrb[0].mxu0
  %v169 = vadd.f32 0.0, %v168
  %v170 = vpop.f32.mrb[0].mxu0
  %171 = vmatprep.mubr.bf16.mxu0 0
  %172 = vmatmul.mubr.bf16.gmra.mrb[0].mxu0 %v48
  %v173 = vpop.f32.mrb[0].mxu0
  %v174 = vadd.f32 0.0, %v173
  %v175 = vpop.f32.mrb[0].mxu0
  %v176 = vpop.f32.mrb[0].mxu0
  %v177 = vadd.f32 0.0, %v176
  %v178 = vpop.f32.mrb[0].mxu0
  %179 = vmatprep.mubr.bf16.mxu0 0
  %180 = vmatmul.mubr.bf16.gmra.mrb[0].mxu0 %v49
  %v181 = vpop.f32.mrb[0].mxu0
  %v182 = vadd.f32 0.0, %v181
  %v183 = vpop.f32.mrb[0].mxu0
  %v184 = vpop.f32.mrb[0].mxu0
  %v185 = vadd.f32 0.0, %v184
  %v186 = vpop.f32.mrb[0].mxu0
  %187 = vmatprep.mubr.bf16.mxu0 0
  %188 = vmatmul.mubr.bf16.gmra.mrb[0].mxu0 %v50
  %v189 = vpop.f32.mrb[0].mxu0
  %v190 = vadd.f32 0.0, %v189
  %v191 = vpop.f32.mrb[0].mxu0
  %v192 = vpop.f32.mrb[0].mxu0
  %v193 = vadd.f32 0.0, %v192
  %v194 = vpop.f32.mrb[0].mxu0
  %195 = vdwg.mxu0
  %p196 = scmp.eq.s32.totalorder 0, 0
  // Predicated region
  $region18: #{gcn_forward.7} parent=0 // pred_check
    %p197 = pneg %p196
  $region19: #{gcn_forward.7} parent=0 // pred_check_branch
    %199 = sbr.rel (%p197) target = $region21
  $region20: #{gcn_forward.7} parent=0 // pred_region
    %200 = vst [vmem:[%s4] sm:$0xff] %v134
    %201 = vst [vmem:[%s4 + $0x8] sm:$0xff] %v137
    %202 = vst [vmem:[%s4 + $0x10] sm:$0xff] %v142
    %203 = vst [vmem:[%s4 + $0x18] sm:$0xff] %v145
    %204 = vst [vmem:[%s4 + $0x20] sm:$0xff] %v150
    %205 = vst [vmem:[%s4 + $0x28] sm:$0xff] %v153
    %206 = vst [vmem:[%s4 + $0x30] sm:$0xff] %v158
    %207 = vst [vmem:[%s4 + $0x38] sm:$0xff] %v161
    %208 = vst [vmem:[%s4 + $0x40] sm:$0xff] %v166
    %209 = vst [vmem:[%s4 + $0x48] sm:$0xff] %v169
    %210 = vst [vmem:[%s4 + $0x50] sm:$0xff] %v174
    %211 = vst [vmem:[%s4 + $0x58] sm:$0xff] %v177
    %212 = vst [vmem:[%s4 + $0x60] sm:$0xff] %v182
    %213 = vst [vmem:[%s4 + $0x68] sm:$0xff] %v185
    %214 = vst [vmem:[%s4 + $0x70] sm:$0xff] %v190
    %215 = vst [vmem:[%s4 + $0x78] sm:$0xff] %v193
  $region21: #{gcn_forward.7} parent=0 // pred_fallthru
    _
  %p216 = scmp.ne.s32.totalorder 0, 0
  // Predicated region
  $region22: #{gcn_forward.7} parent=0 // pred_check
    %p217 = pneg %p216
  $region23: #{gcn_forward.7} parent=0 // pred_check_branch
    %219 = sbr.rel (%p217) target = $region25
  $region24: #{gcn_forward.7} parent=0 // pred_region
    %v220 = vld [vmem:[%s4] sm:$0xff]
    %v221 = vld [vmem:[%s4 + $0x8] sm:$0xff]
    %v222 = vld [vmem:[%s4 + $0x10] sm:$0xff]
    %v223 = vld [vmem:[%s4 + $0x18] sm:$0xff]
    %v224 = vld [vmem:[%s4 + $0x20] sm:$0xff]
    %v225 = vld [vmem:[%s4 + $0x28] sm:$0xff]
    %v226 = vld [vmem:[%s4 + $0x30] sm:$0xff]
    %v227 = vld [vmem:[%s4 + $0x38] sm:$0xff]
    %v228 = vld [vmem:[%s4 + $0x40] sm:$0xff]
    %v229 = vld [vmem:[%s4 + $0x48] sm:$0xff]
    %v230 = vld [vmem:[%s4 + $0x50] sm:$0xff]
    %v231 = vld [vmem:[%s4 + $0x58] sm:$0xff]
    %v232 = vld [vmem:[%s4 + $0x60] sm:$0xff]
    %v233 = vld [vmem:[%s4 + $0x68] sm:$0xff]
    %v234 = vld [vmem:[%s4 + $0x70] sm:$0xff]
    %v235 = vld [vmem:[%s4 + $0x78] sm:$0xff]
    %v236 = vadd.f32 %v220, %v134
    %v237 = vadd.f32 %v221, %v137
    %v238 = vadd.f32 %v222, %v142
    %v239 = vadd.f32 %v223, %v145
    %v240 = vadd.f32 %v224, %v150
    %v241 = vadd.f32 %v225, %v153
    %v242 = vadd.f32 %v226, %v158
    %v243 = vadd.f32 %v227, %v161
    %v244 = vadd.f32 %v228, %v166
    %v245 = vadd.f32 %v229, %v169
    %v246 = vadd.f32 %v230, %v174
    %v247 = vadd.f32 %v231, %v177
    %v248 = vadd.f32 %v232, %v182
    %v249 = vadd.f32 %v233, %v185
    %v250 = vadd.f32 %v234, %v190
    %v251 = vadd.f32 %v235, %v193
    %252 = vst [vmem:[%s4] sm:$0xff] %v236
    %253 = vst [vmem:[%s4 + $0x8] sm:$0xff] %v237
    %254 = vst [vmem:[%s4 + $0x10] sm:$0xff] %v238
    %255 = vst [vmem:[%s4 + $0x18] sm:$0xff] %v239
    %256 = vst [vmem:[%s4 + $0x20] sm:$0xff] %v240
    %257 = vst [vmem:[%s4 + $0x28] sm:$0xff] %v241
    %258 = vst [vmem:[%s4 + $0x30] sm:$0xff] %v242
    %259 = vst [vmem:[%s4 + $0x38] sm:$0xff] %v243
    %260 = vst [vmem:[%s4 + $0x40] sm:$0xff] %v244
    %261 = vst [vmem:[%s4 + $0x48] sm:$0xff] %v245
    %262 = vst [vmem:[%s4 + $0x50] sm:$0xff] %v246
    %263 = vst [vmem:[%s4 + $0x58] sm:$0xff] %v247
    %264 = vst [vmem:[%s4 + $0x60] sm:$0xff] %v248
    %265 = vst [vmem:[%s4 + $0x68] sm:$0xff] %v249
    %266 = vst [vmem:[%s4 + $0x70] sm:$0xff] %v250
    %267 = vst [vmem:[%s4 + $0x78] sm:$0xff] %v251
  $region25: #{gcn_forward.7} parent=0 // pred_fallthru
    _
  // Predicated region
  $region26: #{gcn_forward.7} parent=0 // pred_check
    %p268 = pneg %p196
  $region27: #{gcn_forward.7} parent=0 // pred_check_branch
    %270 = sbr.rel (%p268) target = $region29
  $region28: #{gcn_forward.7} parent=0 // pred_region
    %v271 = vld [vmem:[%s4] sm:$0xff]
    %v272 = vld [vmem:[%s4 + $0x8] sm:$0xff]
    %v273 = vld [vmem:[%s4 + $0x10] sm:$0xff]
    %v274 = vld [vmem:[%s4 + $0x18] sm:$0xff]
    %v275 = vld [vmem:[%s4 + $0x20] sm:$0xff]
    %v276 = vld [vmem:[%s4 + $0x28] sm:$0xff]
    %v277 = vld [vmem:[%s4 + $0x30] sm:$0xff]
    %v278 = vld [vmem:[%s4 + $0x38] sm:$0xff]
    %v279 = vld [vmem:[%s4 + $0x40] sm:$0xff]
    %v280 = vld [vmem:[%s4 + $0x48] sm:$0xff]
    %v281 = vld [vmem:[%s4 + $0x50] sm:$0xff]
    %v282 = vld [vmem:[%s4 + $0x58] sm:$0xff]
    %v283 = vld [vmem:[%s4 + $0x60] sm:$0xff]
    %v284 = vld [vmem:[%s4 + $0x68] sm:$0xff]
    %v285 = vld [vmem:[%s4 + $0x70] sm:$0xff]
    %v286 = vld [vmem:[%s4 + $0x78] sm:$0xff]
    %v287 = vld [vmem:[%s3] sm:$0xff]
    %v288 = vld [vmem:[%s3 + $0x8] sm:$0xff]
    %v289 = vld [vmem:[%s3 + $0x10] sm:$0xff]
    %v290 = vld [vmem:[%s3 + $0x18] sm:$0xff]
    %v291 = vld [vmem:[%s3 + $0x20] sm:$0xff]
    %v292 = vld [vmem:[%s3 + $0x28] sm:$0xff]
    %v293 = vld [vmem:[%s3 + $0x30] sm:$0xff]
    %v294 = vld [vmem:[%s3 + $0x38] sm:$0xff]
    %v295 = vld [vmem:[%s3 + $0x40] sm:$0xff]
    %v296 = vld [vmem:[%s3 + $0x48] sm:$0xff]
    %v297 = vld [vmem:[%s3 + $0x50] sm:$0xff]
    %v298 = vld [vmem:[%s3 + $0x58] sm:$0xff]
    %v299 = vld [vmem:[%s3 + $0x60] sm:$0xff]
    %v300 = vld [vmem:[%s3 + $0x68] sm:$0xff]
    %v301 = vld [vmem:[%s3 + $0x70] sm:$0xff]
    %v302 = vld [vmem:[%s3 + $0x78] sm:$0xff]
    %304 = vset.pattern.permute.xlu0 0
    %305 = vperm.xlu0 %304, %v287
    %v306 = vpop.permute.xlu0 %305
    %309 = vset.pattern.permute.xlu0 0
    %310 = vperm.xlu0 %309, %v288
    %v311 = vpop.permute.xlu0 %310
    %314 = vset.pattern.permute.xlu0 0
    %315 = vperm.xlu0 %314, %v289
    %v316 = vpop.permute.xlu0 %315
    %319 = vset.pattern.permute.xlu0 0
    %320 = vperm.xlu0 %319, %v290
    %v321 = vpop.permute.xlu0 %320
    %324 = vset.pattern.permute.xlu0 0
    %325 = vperm.xlu0 %324, %v291
    %v326 = vpop.permute.xlu0 %325
    %329 = vset.pattern.permute.xlu0 0
    %330 = vperm.xlu0 %329, %v292
    %v331 = vpop.permute.xlu0 %330
    %334 = vset.pattern.permute.xlu0 0
    %335 = vperm.xlu0 %334, %v293
    %v336 = vpop.permute.xlu0 %335
    %339 = vset.pattern.permute.xlu0 0
    %340 = vperm.xlu0 %339, %v294
    %v341 = vpop.permute.xlu0 %340
    %344 = vset.pattern.permute.xlu0 0
    %345 = vperm.xlu0 %344, %v295
    %v346 = vpop.permute.xlu0 %345
    %349 = vset.pattern.permute.xlu0 0
    %350 = vperm.xlu0 %349, %v296
    %v351 = vpop.permute.xlu0 %350
    %354 = vset.pattern.permute.xlu0 0
    %355 = vperm.xlu0 %354, %v297
    %v356 = vpop.permute.xlu0 %355
    %359 = vset.pattern.permute.xlu0 0
    %360 = vperm.xlu0 %359, %v298
    %v361 = vpop.permute.xlu0 %360
    %364 = vset.pattern.permute.xlu0 0
    %365 = vperm.xlu0 %364, %v299
    %v366 = vpop.permute.xlu0 %365
    %369 = vset.pattern.permute.xlu0 0
    %370 = vperm.xlu0 %369, %v300
    %v371 = vpop.permute.xlu0 %370
    %374 = vset.pattern.permute.xlu0 0
    %375 = vperm.xlu0 %374, %v301
    %v376 = vpop.permute.xlu0 %375
    %379 = vset.pattern.permute.xlu0 0
    %380 = vperm.xlu0 %379, %v302
    %v381 = vpop.permute.xlu0 %380
    %v383 = vmul.f32 %v271, %v306
    %v384 = vmul.f32 %v272, %v311
    %v385 = vmul.f32 %v273, %v316
    %v386 = vmul.f32 %v274, %v321
    %v387 = vmul.f32 %v275, %v326
    %v388 = vmul.f32 %v276, %v331
    %v389 = vmul.f32 %v277, %v336
    %v390 = vmul.f32 %v278, %v341
    %v391 = vmul.f32 %v279, %v346
    %v392 = vmul.f32 %v280, %v351
    %v393 = vmul.f32 %v281, %v356
    %v394 = vmul.f32 %v282, %v361
    %v395 = vmul.f32 %v283, %v366
    %v396 = vmul.f32 %v284, %v371
    %v397 = vmul.f32 %v285, %v376
    %v398 = vmul.f32 %v286, %v381
    %v399 = vld [vmem:[%s2] sm:$0x1]
    %v401 = vlaneseq
    %v402 = vshrl.u32 %v401, 7
    %v403 = vsub.s32 0, %v402
    %v404 = vrot.slane %v399, %v403
    %v406 = vadd.f32 %v383, %v404
    %v407 = vadd.f32 %v384, %v404
    %v408 = vadd.f32 %v385, %v404
    %v409 = vadd.f32 %v386, %v404
    %v410 = vadd.f32 %v387, %v404
    %v411 = vadd.f32 %v388, %v404
    %v412 = vadd.f32 %v389, %v404
    %v413 = vadd.f32 %v390, %v404
    %v414 = vadd.f32 %v391, %v404
    %v415 = vadd.f32 %v392, %v404
    %v416 = vadd.f32 %v393, %v404
    %v417 = vadd.f32 %v394, %v404
    %v418 = vadd.f32 %v395, %v404
    %v419 = vadd.f32 %v396, %v404
    %v420 = vadd.f32 %v397, %v404
    %v421 = vadd.f32 %v398, %v404
    %v422 = vlaneseq
    %v423 = vand.u32 %v422, 127
    %vm424 = vcmp.lt.s32.totalorder %v423, 8
    %v425 = vsel %vm424, %v406, -inf
    %v426 = vsel %vm424, %v407, -inf
    %v427 = vsel %vm424, %v408, -inf
    %v428 = vsel %vm424, %v409, -inf
    %v429 = vsel %vm424, %v410, -inf
    %v430 = vsel %vm424, %v411, -inf
    %v431 = vsel %vm424, %v412, -inf
    %v432 = vsel %vm424, %v413, -inf
    %v433 = vsel %vm424, %v414, -inf
    %v434 = vsel %vm424, %v415, -inf
    %v435 = vsel %vm424, %v416, -inf
    %v436 = vsel %vm424, %v417, -inf
    %v437 = vsel %vm424, %v418, -inf
    %v438 = vsel %vm424, %v419, -inf
    %v439 = vsel %vm424, %v420, -inf
    %v440 = vsel %vm424, %v421, -inf
    %441 = vmax.xlane.f32.xlu0 %v425
    %v442 = vpop.xlane.xlu0 %441
    %443 = vmax.xlane.f32.xlu0 %v426
    %v444 = vpop.xlane.xlu0 %443
    %445 = vmax.xlane.f32.xlu0 %v427
    %v446 = vpop.xlane.xlu0 %445
    %447 = vmax.xlane.f32.xlu0 %v428
    %v448 = vpop.xlane.xlu0 %447
    %449 = vmax.xlane.f32.xlu0 %v429
    %v450 = vpop.xlane.xlu0 %449
    %451 = vmax.xlane.f32.xlu0 %v430
    %v452 = vpop.xlane.xlu0 %451
    %453 = vmax.xlane.f32.xlu0 %v431
    %v454 = vpop.xlane.xlu0 %453
    %455 = vmax.xlane.f32.xlu0 %v432
    %v456 = vpop.xlane.xlu0 %455
    %457 = vmax.xlane.f32.xlu0 %v433
    %v458 = vpop.xlane.xlu0 %457
    %459 = vmax.xlane.f32.xlu0 %v434
    %v460 = vpop.xlane.xlu0 %459
    %461 = vmax.xlane.f32.xlu0 %v435
    %v462 = vpop.xlane.xlu0 %461
    %463 = vmax.xlane.f32.xlu0 %v436
    %v464 = vpop.xlane.xlu0 %463
    %465 = vmax.xlane.f32.xlu0 %v437
    %v466 = vpop.xlane.xlu0 %465
    %467 = vmax.xlane.f32.xlu0 %v438
    %v468 = vpop.xlane.xlu0 %467
    %469 = vmax.xlane.f32.xlu0 %v439
    %v470 = vpop.xlane.xlu0 %469
    %471 = vmax.xlane.f32.xlu0 %v440
    %v472 = vpop.xlane.xlu0 %471
    %v473 = vsub.f32 %v425, %v442
    %v474 = vsub.f32 %v426, %v444
    %v475 = vsub.f32 %v427, %v446
    %v476 = vsub.f32 %v428, %v448
    %v477 = vsub.f32 %v429, %v450
    %v478 = vsub.f32 %v430, %v452
    %v479 = vsub.f32 %v431, %v454
    %v480 = vsub.f32 %v432, %v456
    %v481 = vsub.f32 %v433, %v458
    %v482 = vsub.f32 %v434, %v460
    %v483 = vsub.f32 %v435, %v462
    %v484 = vsub.f32 %v436, %v464
    %v485 = vsub.f32 %v437, %v466
    %v486 = vsub.f32 %v438, %v468
    %v487 = vsub.f32 %v439, %v470
    %v488 = vsub.f32 %v440, %v472
    %v489 = vmul.f32 %v473, 1.442695
    %v490 = vpow.pop %v489
    %v491 = vmul.f32 %v474, 1.442695
    %v492 = vpow.pop %v491
    %v493 = vmul.f32 %v475, 1.442695
    %v494 = vpow.pop %v493
    %v495 = vmul.f32 %v476, 1.442695
    %v496 = vpow.pop %v495
    %v497 = vmul.f32 %v477, 1.442695
    %v498 = vpow.pop %v497
    %v499 = vmul.f32 %v478, 1.442695
    %v500 = vpow.pop %v499
    %v501 = vmul.f32 %v479, 1.442695
    %v502 = vpow.pop %v501
    %v503 = vmul.f32 %v480, 1.442695
    %v504 = vpow.pop %v503
    %v505 = vmul.f32 %v481, 1.442695
    %v506 = vpow.pop %v505
    %v507 = vmul.f32 %v482, 1.442695
    %v508 = vpow.pop %v507
    %v509 = vmul.f32 %v483, 1.442695
    %v510 = vpow.pop %v509
    %v511 = vmul.f32 %v484, 1.442695
    %v512 = vpow.pop %v511
    %v513 = vmul.f32 %v485, 1.442695
    %v514 = vpow.pop %v513
    %v515 = vmul.f32 %v486, 1.442695
    %v516 = vpow.pop %v515
    %v517 = vmul.f32 %v487, 1.442695
    %v518 = vpow.pop %v517
    %v519 = vmul.f32 %v488, 1.442695
    %v520 = vpow.pop %v519
    %521 = vadd.xlane.f32.xlu0 %v490
    %v522 = vpop.xlane.xlu0 %521
    %523 = vadd.xlane.f32.xlu0 %v492
    %v524 = vpop.xlane.xlu0 %523
    %525 = vadd.xlane.f32.xlu0 %v494
    %v526 = vpop.xlane.xlu0 %525
    %527 = vadd.xlane.f32.xlu0 %v496
    %v528 = vpop.xlane.xlu0 %527
    %529 = vadd.xlane.f32.xlu0 %v498
    %v530 = vpop.xlane.xlu0 %529
    %531 = vadd.xlane.f32.xlu0 %v500
    %v532 = vpop.xlane.xlu0 %531
    %533 = vadd.xlane.f32.xlu0 %v502
    %v534 = vpop.xlane.xlu0 %533
    %535 = vadd.xlane.f32.xlu0 %v504
    %v536 = vpop.xlane.xlu0 %535
    %537 = vadd.xlane.f32.xlu0 %v506
    %v538 = vpop.xlane.xlu0 %537
    %539 = vadd.xlane.f32.xlu0 %v508
    %v540 = vpop.xlane.xlu0 %539
    %541 = vadd.xlane.f32.xlu0 %v510
    %v542 = vpop.xlane.xlu0 %541
    %543 = vadd.xlane.f32.xlu0 %v512
    %v544 = vpop.xlane.xlu0 %543
    %545 = vadd.xlane.f32.xlu0 %v514
    %v546 = vpop.xlane.xlu0 %545
    %547 = vadd.xlane.f32.xlu0 %v516
    %v548 = vpop.xlane.xlu0 %547
    %549 = vadd.xlane.f32.xlu0 %v518
    %v550 = vpop.xlane.xlu0 %549
    %551 = vadd.xlane.f32.xlu0 %v520
    %v552 = vpop.xlane.xlu0 %551
    %v553 = vlog2.pop %v522
    %v554 = vmul.f32 %v553, 0.6931472
    %v555 = vlog2.pop %v524
    %v556 = vmul.f32 %v555, 0.6931472
    %v557 = vlog2.pop %v526
    %v558 = vmul.f32 %v557, 0.6931472
    %v559 = vlog2.pop %v528
    %v560 = vmul.f32 %v559, 0.6931472
    %v561 = vlog2.pop %v530
    %v562 = vmul.f32 %v561, 0.6931472
    %v563 = vlog2.pop %v532
    %v564 = vmul.f32 %v563, 0.6931472
    %v565 = vlog2.pop %v534
    %v566 = vmul.f32 %v565, 0.6931472
    %v567 = vlog2.pop %v536
    %v568 = vmul.f32 %v567, 0.6931472
    %v569 = vlog2.pop %v538
    %v570 = vmul.f32 %v569, 0.6931472
    %v571 = vlog2.pop %v540
    %v572 = vmul.f32 %v571, 0.6931472
    %v573 = vlog2.pop %v542
    %v574 = vmul.f32 %v573, 0.6931472
    %v575 = vlog2.pop %v544
    %v576 = vmul.f32 %v575, 0.6931472
    %v577 = vlog2.pop %v546
    %v578 = vmul.f32 %v577, 0.6931472
    %v579 = vlog2.pop %v548
    %v580 = vmul.f32 %v579, 0.6931472
    %v581 = vlog2.pop %v550
    %v582 = vmul.f32 %v581, 0.6931472
    %v583 = vlog2.pop %v552
    %v584 = vmul.f32 %v583, 0.6931472
    %v585 = vadd.f32 %v442, %v554
    %v586 = vadd.f32 %v444, %v556
    %v587 = vadd.f32 %v446, %v558
    %v588 = vadd.f32 %v448, %v560
    %v589 = vadd.f32 %v450, %v562
    %v590 = vadd.f32 %v452, %v564
    %v591 = vadd.f32 %v454, %v566
    %v592 = vadd.f32 %v456, %v568
    %v593 = vadd.f32 %v458, %v570
    %v594 = vadd.f32 %v460, %v572
    %v595 = vadd.f32 %v462, %v574
    %v596 = vadd.f32 %v464, %v576
    %v597 = vadd.f32 %v466, %v578
    %v598 = vadd.f32 %v468, %v580
    %v599 = vadd.f32 %v470, %v582
    %v600 = vadd.f32 %v472, %v584
    %v601 = vsub.f32 %v425, %v585
    %v602 = vsub.f32 %v426, %v586
    %v603 = vsub.f32 %v427, %v587
    %v604 = vsub.f32 %v428, %v588
    %v605 = vsub.f32 %v429, %v589
    %v606 = vsub.f32 %v430, %v590
    %v607 = vsub.f32 %v431, %v591
    %v608 = vsub.f32 %v432, %v592
    %v609 = vsub.f32 %v433, %v593
    %v610 = vsub.f32 %v434, %v594
    %v611 = vsub.f32 %v435, %v595
    %v612 = vsub.f32 %v436, %v596
    %v613 = vsub.f32 %v437, %v597
    %v614 = vsub.f32 %v438, %v598
    %v615 = vsub.f32 %v439, %v599
    %v616 = vsub.f32 %v440, %v600
    %617 = vst [vmem:[%s4] sm:$0xff] %v601
    %618 = vst [vmem:[%s4 + $0x8] sm:$0xff] %v602
    %619 = vst [vmem:[%s4 + $0x10] sm:$0xff] %v603
    %620 = vst [vmem:[%s4 + $0x18] sm:$0xff] %v604
    %621 = vst [vmem:[%s4 + $0x20] sm:$0xff] %v605
    %622 = vst [vmem:[%s4 + $0x28] sm:$0xff] %v606
    %623 = vst [vmem:[%s4 + $0x30] sm:$0xff] %v607
    %624 = vst [vmem:[%s4 + $0x38] sm:$0xff] %v608
    %625 = vst [vmem:[%s4 + $0x40] sm:$0xff] %v609
    %626 = vst [vmem:[%s4 + $0x48] sm:$0xff] %v610
    %627 = vst [vmem:[%s4 + $0x50] sm:$0xff] %v611
    %628 = vst [vmem:[%s4 + $0x58] sm:$0xff] %v612
    %629 = vst [vmem:[%s4 + $0x60] sm:$0xff] %v613
    %630 = vst [vmem:[%s4 + $0x68] sm:$0xff] %v614
    %631 = vst [vmem:[%s4 + $0x70] sm:$0xff] %v615
    %632 = vst [vmem:[%s4 + $0x78] sm:$0xff] %v616
  $region29: #{gcn_forward.7} parent=0 // pred_fallthru
    _
  // Predicated region
  $region30: #{gcn_forward.7} parent=0 // pred_check
    _
  $region31: #{gcn_forward.7} parent=0 // pred_check_branch
    %634 = sbr.rel (0) target = $region33
  $region32: #{gcn_forward.7} parent=0 // pred_region
    _
  $region33: #{gcn_forward.7} parent=0 // pred_fallthru
    _
  // Predicated region
  $region34: #{gcn_forward.7} parent=0 // pred_check
    _
  $region35: #{gcn_forward.7} parent=0 // pred_check_branch
    %636 = sbr.rel (0) target = $region37
  $region36: #{gcn_forward.7} parent=0 // pred_region
    _
  $region37: #{gcn_forward.7} parent=0 // pred_fallthru
    _

// kernel: gcn_forward.4
$region0: #{gcn_forward.4}
  #allocation0 [shape = 'u32[]', space=smem, size = 0x4, offset = 0x4, fixed_abs, tag = 'smem constant byte address 0x4 - core index']
  #allocation1 [shape = 'u32[144,128]{1,0:T(1,128)}', space=vmem, size = 0x12000, scoped, tag = 'internal scratch']
  %s0 = inlined_call_operand.vmem [shape: bf16[128,128], index: 0, kind: input, shape index: {}]
  %s1 = inlined_call_operand.vmem [shape: bf16[128,128], index: 1, kind: input, shape index: {}]
  %s2 = inlined_call_operand.vmem [shape: f32[128,1], index: 2, kind: input, shape index: {}]
  %s3 = inlined_call_operand.vmem [shape: bf16[128,128], index: 3, kind: output, shape index: {}]
  %s4 = sld [smem:[#allocation0]]
  $region22: #{gcn_forward.4} parent=0
    _
  %s6 = ssub.s32 1, %s4
  %s7 = scalar_select 0, %s6, %s4
  // Predicated region
  $region2: #{gcn_forward.4} parent=0 // pred_check
    _
  $region3: #{gcn_forward.4} parent=0 // pred_check_branch
    %9 = sbr.rel (0) target = $region5
  $region4: #{gcn_forward.4} parent=0 // pred_region
    _
  $region5: #{gcn_forward.4} parent=0 // pred_fallthru
    _
  // Predicated region
  $region6: #{gcn_forward.4} parent=0 // pred_check
    _
  $region7: #{gcn_forward.4} parent=0 // pred_check_branch
    %11 = sbr.rel (0) target = $region9
  $region8: #{gcn_forward.4} parent=0 // pred_region
    _
  $region9: #{gcn_forward.4} parent=0 // pred_fallthru
    _
  // Predicated region
  $region10: #{gcn_forward.4} parent=0 // pred_check
    _
  $region11: #{gcn_forward.4} parent=0 // pred_check_branch
    %13 = sbr.rel (0) target = $region13
  $region12: #{gcn_forward.4} parent=0 // pred_region
    _
  $region13: #{gcn_forward.4} parent=0 // pred_fallthru
    _
  %v15 = vld [vmem:[%s0] sm:$0xf]
  %v16 = vld [vmem:[%s0 + $0x4] sm:$0xf]
  %v17 = vld [vmem:[%s0 + $0x8] sm:$0xf]
  %v18 = vld [vmem:[%s0 + $0xc] sm:$0xf]
  %v19 = vld [vmem:[%s0 + $0x10] sm:$0xf]
  %v20 = vld [vmem:[%s0 + $0x14] sm:$0xf]
  %v21 = vld [vmem:[%s0 + $0x18] sm:$0xf]
  %v22 = vld [vmem:[%s0 + $0x1c] sm:$0xf]
  %v23 = vld [vmem:[%s0 + $0x20] sm:$0xf]
  %v24 = vld [vmem:[%s0 + $0x24] sm:$0xf]
  %v25 = vld [vmem:[%s0 + $0x28] sm:$0xf]
  %v26 = vld [vmem:[%s0 + $0x2c] sm:$0xf]
  %v27 = vld [vmem:[%s0 + $0x30] sm:$0xf]
  %v28 = vld [vmem:[%s0 + $0x34] sm:$0xf]
  %v29 = vld [vmem:[%s0 + $0x38] sm:$0xf]
  %v30 = vld [vmem:[%s0 + $0x3c] sm:$0xf]
  %v31 = vld [vmem:[%s1] sm:$0xf]
  %v32 = vld [vmem:[%s1 + $0x4] sm:$0xf]
  %v33 = vld [vmem:[%s1 + $0x8] sm:$0xf]
  %v34 = vld [vmem:[%s1 + $0xc] sm:$0xf]
  %v35 = vld [vmem:[%s1 + $0x10] sm:$0xf]
  %v36 = vld [vmem:[%s1 + $0x14] sm:$0xf]
  %v37 = vld [vmem:[%s1 + $0x18] sm:$0xf]
  %v38 = vld [vmem:[%s1 + $0x1c] sm:$0xf]
  %v39 = vld [vmem:[%s1 + $0x20] sm:$0xf]
  %v40 = vld [vmem:[%s1 + $0x24] sm:$0xf]
  %v41 = vld [vmem:[%s1 + $0x28] sm:$0xf]
  %v42 = vld [vmem:[%s1 + $0x2c] sm:$0xf]
  %v43 = vld [vmem:[%s1 + $0x30] sm:$0xf]
  %v44 = vld [vmem:[%s1 + $0x34] sm:$0xf]
  %v45 = vld [vmem:[%s1 + $0x38] sm:$0xf]
  %v46 = vld [vmem:[%s1 + $0x3c] sm:$0xf]
  %v63 = vunpack.c.l.b16 %v15
  %v64 = vunpack.c.l.b16 %v16
  %v65 = vunpack.c.l.b16 %v17
  %v66 = vunpack.c.l.b16 %v18
  %v67 = vunpack.c.l.b16 %v19
  %v68 = vunpack.c.l.b16 %v20
  %v69 = vunpack.c.l.b16 %v21
  %v70 = vunpack.c.l.b16 %v22
  %v71 = vunpack.c.l.b16 %v23
  %v72 = vunpack.c.l.b16 %v24
  %v73 = vunpack.c.l.b16 %v25
  %v74 = vunpack.c.l.b16 %v26
  %v75 = vunpack.c.l.b16 %v27
  %v76 = vunpack.c.l.b16 %v28
  %v77 = vunpack.c.l.b16 %v29
  %v78 = vunpack.c.l.b16 %v30
  %v79 = vpack.c.b16 %v64, %v63
  %v80 = vpack.c.b16 %v66, %v65
  %v81 = vpack.c.b16 %v68, %v67
  %v82 = vpack.c.b16 %v70, %v69
  %v83 = vpack.c.b16 %v72, %v71
  %v84 = vpack.c.b16 %v74, %v73
  %v85 = vpack.c.b16 %v76, %v75
  %v86 = vpack.c.b16 %v78, %v77
  %v111 = vunpack.c.l.b16 %v31
  %v112 = vunpack.c.l.b16 %v32
  %v113 = vunpack.c.l.b16 %v33
  %v114 = vunpack.c.l.b16 %v34
  %v115 = vunpack.c.l.b16 %v35
  %v116 = vunpack.c.l.b16 %v36
  %v117 = vunpack.c.l.b16 %v37
  %v118 = vunpack.c.l.b16 %v38
  %v119 = vunpack.c.l.b16 %v39
  %v120 = vunpack.c.l.b16 %v40
  %v121 = vunpack.c.l.b16 %v41
  %v122 = vunpack.c.l.b16 %v42
  %v123 = vunpack.c.l.b16 %v43
  %v124 = vunpack.c.l.b16 %v44
  %v125 = vunpack.c.l.b16 %v45
  %v126 = vunpack.c.l.b16 %v46
  %v127 = vpack.c.b16 %v112, %v111
  %v128 = vpack.c.b16 %v114, %v113
  %v129 = vpack.c.b16 %v116, %v115
  %v130 = vpack.c.b16 %v118, %v117
  %v131 = vpack.c.b16 %v120, %v119
  %v132 = vpack.c.b16 %v122, %v121
  %v133 = vpack.c.b16 %v124, %v123
  %v134 = vpack.c.b16 %v126, %v125
  %143 = vmatprep.subr.bf16.mxu0 0
  %144 = vmatpush1.bf16.msra.mxu0 %v127
  %145 = vmatprep.subr.bf16.mxu0 0
  %146 = vmatpush1.bf16.msra.mxu0 %v128
  %147 = vmatprep.subr.bf16.mxu0 0
  %148 = vmatpush1.bf16.msra.mxu0 %v129
  %149 = vmatprep.subr.bf16.mxu0 0
  %150 = vmatpush1.bf16.msra.mxu0 %v130
  %151 = vmatprep.subr.bf16.mxu0 0
  %152 = vmatpush1.bf16.msra.mxu0 %v131
  %153 = vmatprep.subr.bf16.mxu0 0
  %154 = vmatpush1.bf16.msra.mxu0 %v132
  %155 = vmatprep.subr.bf16.mxu0 0
  %156 = vmatpush1.bf16.msra.mxu0 %v133
  %157 = vmatprep.subr.bf16.mxu0 0
  %158 = vmatpush1.bf16.msra.mxu0 %v134
  %159 = vmatprep.subr.bf16.mxu0 0
  %160 = vmatpush1.bf16.msra.mxu0 0
  %161 = vmatprep.subr.bf16.mxu0 0
  %162 = vmatpush1.bf16.msra.mxu0 0
  %163 = vmatprep.subr.bf16.mxu0 0
  %164 = vmatpush1.bf16.msra.mxu0 0
  %165 = vmatprep.subr.bf16.mxu0 0
  %166 = vmatpush1.bf16.msra.mxu0 0
  %167 = vmatprep.subr.bf16.mxu0 0
  %168 = vmatpush1.bf16.msra.mxu0 0
  %169 = vmatprep.subr.bf16.mxu0 0
  %170 = vmatpush1.bf16.msra.mxu0 0
  %171 = vmatprep.subr.bf16.mxu0 0
  %172 = vmatpush1.bf16.msra.mxu0 0
  %173 = vmatprep.subr.bf16.mxu0 0
  %174 = vmatpush1.bf16.msra.mxu0 0
  %175 = vmatprep.mubr.bf16.mxu0 0
  %176 = vmatmul.mubr.bf16.gmra.mrb[0].mxu0 %v79
  %v177 = vpop.f32.mrb[0].mxu0
  %v178 = vadd.f32 0.0, %v177
  %v179 = vpop.f32.mrb[0].mxu0
  %v180 = vpop.f32.mrb[0].mxu0
  %v181 = vadd.f32 0.0, %v180
  %v182 = vpop.f32.mrb[0].mxu0
  %183 = vmatprep.mubr.bf16.mxu0 0
  %184 = vmatmul.mubr.bf16.gmra.mrb[0].mxu0 %v80
  %v185 = vpop.f32.mrb[0].mxu0
  %v186 = vadd.f32 0.0, %v185
  %v187 = vpop.f32.mrb[0].mxu0
  %v188 = vpop.f32.mrb[0].mxu0
  %v189 = vadd.f32 0.0, %v188
  %v190 = vpop.f32.mrb[0].mxu0
  %191 = vmatprep.mubr.bf16.mxu0 0
  %192 = vmatmul.mubr.bf16.gmra.mrb[0].mxu0 %v81
  %v193 = vpop.f32.mrb[0].mxu0
  %v194 = vadd.f32 0.0, %v193
  %v195 = vpop.f32.mrb[0].mxu0
  %v196 = vpop.f32.mrb[0].mxu0
  %v197 = vadd.f32 0.0, %v196
  %v198 = vpop.f32.mrb[0].mxu0
  %199 = vmatprep.mubr.bf16.mxu0 0
  %200 = vmatmul.mubr.bf16.gmra.mrb[0].mxu0 %v82
  %v201 = vpop.f32.mrb[0].mxu0
  %v202 = vadd.f32 0.0, %v201
  %v203 = vpop.f32.mrb[0].mxu0
  %v204 = vpop.f32.mrb[0].mxu0
  %v205 = vadd.f32 0.0, %v204
  %v206 = vpop.f32.mrb[0].mxu0
  %207 = vmatprep.mubr.bf16.mxu0 0
  %208 = vmatmul.mubr.bf16.gmra.mrb[0].mxu0 %v83
  %v209 = vpop.f32.mrb[0].mxu0
  %v210 = vadd.f32 0.0, %v209
  %v211 = vpop.f32.mrb[0].mxu0
  %v212 = vpop.f32.mrb[0].mxu0
  %v213 = vadd.f32 0.0, %v212
  %v214 = vpop.f32.mrb[0].mxu0
  %215 = vmatprep.mubr.bf16.mxu0 0
  %216 = vmatmul.mubr.bf16.gmra.mrb[0].mxu0 %v84
  %v217 = vpop.f32.mrb[0].mxu0
  %v218 = vadd.f32 0.0, %v217
  %v219 = vpop.f32.mrb[0].mxu0
  %v220 = vpop.f32.mrb[0].mxu0
  %v221 = vadd.f32 0.0, %v220
  %v222 = vpop.f32.mrb[0].mxu0
  %223 = vmatprep.mubr.bf16.mxu0 0
  %224 = vmatmul.mubr.bf16.gmra.mrb[0].mxu0 %v85
  %v225 = vpop.f32.mrb[0].mxu0
  %v226 = vadd.f32 0.0, %v225
  %v227 = vpop.f32.mrb[0].mxu0
  %v228 = vpop.f32.mrb[0].mxu0
  %v229 = vadd.f32 0.0, %v228
  %v230 = vpop.f32.mrb[0].mxu0
  %231 = vmatprep.mubr.bf16.mxu0 0
  %232 = vmatmul.mubr.bf16.gmra.mrb[0].mxu0 %v86
  %v233 = vpop.f32.mrb[0].mxu0
  %v234 = vadd.f32 0.0, %v233
  %v235 = vpop.f32.mrb[0].mxu0
  %v236 = vpop.f32.mrb[0].mxu0
  %v237 = vadd.f32 0.0, %v236
  %v238 = vpop.f32.mrb[0].mxu0
  %239 = vdwg.mxu0
  %v240 = vld [vmem:[%s2] sm:$0xff]
  %v241 = vld [vmem:[%s2 + $0x8] sm:$0xff]
  %v242 = vld [vmem:[%s2 + $0x10] sm:$0xff]
  %v243 = vld [vmem:[%s2 + $0x18] sm:$0xff]
  %v244 = vld [vmem:[%s2 + $0x20] sm:$0xff]
  %v245 = vld [vmem:[%s2 + $0x28] sm:$0xff]
  %v246 = vld [vmem:[%s2 + $0x30] sm:$0xff]
  %v247 = vld [vmem:[%s2 + $0x38] sm:$0xff]
  %v248 = vld [vmem:[%s2 + $0x40] sm:$0xff]
  %v249 = vld [vmem:[%s2 + $0x48] sm:$0xff]
  %v250 = vld [vmem:[%s2 + $0x50] sm:$0xff]
  %v251 = vld [vmem:[%s2 + $0x58] sm:$0xff]
  %v252 = vld [vmem:[%s2 + $0x60] sm:$0xff]
  %v253 = vld [vmem:[%s2 + $0x68] sm:$0xff]
  %v254 = vld [vmem:[%s2 + $0x70] sm:$0xff]
  %v255 = vld [vmem:[%s2 + $0x78] sm:$0xff]
  %257 = vset.pattern.permute.xlu0 0
  %258 = vperm.xlu0 %257, %v240
  %v259 = vpop.permute.xlu0 %258
  %262 = vset.pattern.permute.xlu0 0
  %263 = vperm.xlu0 %262, %v241
  %v264 = vpop.permute.xlu0 %263
  %267 = vset.pattern.permute.xlu0 0
  %268 = vperm.xlu0 %267, %v242
  %v269 = vpop.permute.xlu0 %268
  %272 = vset.pattern.permute.xlu0 0
  %273 = vperm.xlu0 %272, %v243
  %v274 = vpop.permute.xlu0 %273
  %277 = vset.pattern.permute.xlu0 0
  %278 = vperm.xlu0 %277, %v244
  %v279 = vpop.permute.xlu0 %278
  %282 = vset.pattern.permute.xlu0 0
  %283 = vperm.xlu0 %282, %v245
  %v284 = vpop.permute.xlu0 %283
  %287 = vset.pattern.permute.xlu0 0
  %288 = vperm.xlu0 %287, %v246
  %v289 = vpop.permute.xlu0 %288
  %292 = vset.pattern.permute.xlu0 0
  %293 = vperm.xlu0 %292, %v247
  %v294 = vpop.permute.xlu0 %293
  %297 = vset.pattern.permute.xlu0 0
  %298 = vperm.xlu0 %297, %v248
  %v299 = vpop.permute.xlu0 %298
  %302 = vset.pattern.permute.xlu0 0
  %303 = vperm.xlu0 %302, %v249
  %v304 = vpop.permute.xlu0 %303
  %307 = vset.pattern.permute.xlu0 0
  %308 = vperm.xlu0 %307, %v250
  %v309 = vpop.permute.xlu0 %308
  %312 = vset.pattern.permute.xlu0 0
  %313 = vperm.xlu0 %312, %v251
  %v314 = vpop.permute.xlu0 %313
  %317 = vset.pattern.permute.xlu0 0
  %318 = vperm.xlu0 %317, %v252
  %v319 = vpop.permute.xlu0 %318
  %322 = vset.pattern.permute.xlu0 0
  %323 = vperm.xlu0 %322, %v253
  %v324 = vpop.permute.xlu0 %323
  %327 = vset.pattern.permute.xlu0 0
  %328 = vperm.xlu0 %327, %v254
  %v329 = vpop.permute.xlu0 %328
  %332 = vset.pattern.permute.xlu0 0
  %333 = vperm.xlu0 %332, %v255
  %v334 = vpop.permute.xlu0 %333
  %v336 = vmul.f32 %v178, %v259
  %v337 = vmul.f32 %v181, %v264
  %v338 = vmul.f32 %v186, %v269
  %v339 = vmul.f32 %v189, %v274
  %v340 = vmul.f32 %v194, %v279
  %v341 = vmul.f32 %v197, %v284
  %v342 = vmul.f32 %v202, %v289
  %v343 = vmul.f32 %v205, %v294
  %v344 = vmul.f32 %v210, %v299
  %v345 = vmul.f32 %v213, %v304
  %v346 = vmul.f32 %v218, %v309
  %v347 = vmul.f32 %v221, %v314
  %v348 = vmul.f32 %v226, %v319
  %v349 = vmul.f32 %v229, %v324
  %v350 = vmul.f32 %v234, %v329
  %v351 = vmul.f32 %v237, %v334
  %v352 = vpack.c.bf16 %v337, %v336
  %v353 = vpack.c.bf16 %v339, %v338
  %v354 = vpack.c.bf16 %v341, %v340
  %v355 = vpack.c.bf16 %v343, %v342
  %v356 = vpack.c.bf16 %v345, %v344
  %v357 = vpack.c.bf16 %v347, %v346
  %v358 = vpack.c.bf16 %v349, %v348
  %v359 = vpack.c.bf16 %v351, %v350
  %v368 = vunpack.c.l.b16 %v352
  %v369 = vunpack.c.h.b16 %v352
  %v370 = vunpack.c.l.b16 %v353
  %v371 = vunpack.c.h.b16 %v353
  %v372 = vunpack.c.l.b16 %v354
  %v373 = vunpack.c.h.b16 %v354
  %v374 = vunpack.c.l.b16 %v355
  %v375 = vunpack.c.h.b16 %v355
  %v376 = vunpack.c.l.b16 %v356
  %v377 = vunpack.c.h.b16 %v356
  %v378 = vunpack.c.l.b16 %v357
  %v379 = vunpack.c.h.b16 %v357
  %v380 = vunpack.c.l.b16 %v358
  %v381 = vunpack.c.h.b16 %v358
  %v382 = vunpack.c.l.b16 %v359
  %v383 = vunpack.c.h.b16 %v359
  %v384 = vpack.c.b16 %v368, %v368
  %v385 = vpack.c.b16 %v369, %v369
  %v386 = vpack.c.b16 %v370, %v370
  %v387 = vpack.c.b16 %v371, %v371
  %v388 = vpack.c.b16 %v372, %v372
  %v389 = vpack.c.b16 %v373, %v373
  %v390 = vpack.c.b16 %v374, %v374
  %v391 = vpack.c.b16 %v375, %v375
  %v392 = vpack.c.b16 %v376, %v376
  %v393 = vpack.c.b16 %v377, %v377
  %v394 = vpack.c.b16 %v378, %v378
  %v395 = vpack.c.b16 %v379, %v379
  %v396 = vpack.c.b16 %v380, %v380
  %v397 = vpack.c.b16 %v381, %v381
  %v398 = vpack.c.b16 %v382, %v382
  %v399 = vpack.c.b16 %v383, %v383
  %416 = vst [vmem:[%s3] sm:$0xf] %v384
  %417 = vst [vmem:[%s3 + $0x4] sm:$0xf] %v385
  %418 = vst [vmem:[%s3 + $0x8] sm:$0xf] %v386
  %419 = vst [vmem:[%s3 + $0xc] sm:$0xf] %v387
  %420 = vst [vmem:[%s3 + $0x10] sm:$0xf] %v388
  %421 = vst [vmem:[%s3 + $0x14] sm:$0xf] %v389
  %422 = vst [vmem:[%s3 + $0x18] sm:$0xf] %v390
  %423 = vst [vmem:[%s3 + $0x1c] sm:$0xf] %v391
  %424 = vst [vmem:[%s3 + $0x20] sm:$0xf] %v392
  %425 = vst [vmem:[%s3 + $0x24] sm:$0xf] %v393
  %426 = vst [vmem:[%s3 + $0x28] sm:$0xf] %v394
  %427 = vst [vmem:[%s3 + $0x2c] sm:$0xf] %v395
  %428 = vst [vmem:[%s3 + $0x30] sm:$0xf] %v396
  %429 = vst [vmem:[%s3 + $0x34] sm:$0xf] %v397
  %430 = vst [vmem:[%s3 + $0x38] sm:$0xf] %v398
  %431 = vst [vmem:[%s3 + $0x3c] sm:$0xf] %v399
  // Predicated region
  $region14: #{gcn_forward.4} parent=0 // pred_check
    _
  $region15: #{gcn_forward.4} parent=0 // pred_check_branch
    %433 = sbr.rel (0) target = $region17
  $region16: #{gcn_forward.4} parent=0 // pred_region
    _
  $region17: #{gcn_forward.4} parent=0 // pred_fallthru
    _
  // Predicated region
  $region18: #{gcn_forward.4} parent=0 // pred_check
    _
  $region19: #{gcn_forward.4} parent=0 // pred_check_branch
    %435 = sbr.rel (0) target = $region21
  $region20: #{gcn_forward.4} parent=0 // pred_region
    _
  $region21: #{gcn_forward.4} parent=0 // pred_fallthru
    _

// kernel: gcn_forward.5
$region0: #{gcn_forward.5}
  #allocation0 [shape = 'u32[]', space=smem, size = 0x4, offset = 0x4, fixed_abs, tag = 'smem constant byte address 0x4 - core index']
  #allocation1 [shape = 'u32[144,128]{1,0:T(1,128)}', space=vmem, size = 0x12000, scoped, tag = 'internal scratch']
  #allocation2 [shape = 'f32[128,128]{1,0:T(8,128)}', space=vmem, size = 0x10000, scoped, tag = 'scratch operand']
  %s0 = inlined_call_operand.vmem [shape: s8[128,128], index: 0, kind: input, shape index: {}]
  %s1 = inlined_call_operand.vmem [shape: bf16[128,128], index: 1, kind: input, shape index: {}]
  %s2 = inlined_call_operand.vmem [shape: f32[1,128], index: 2, kind: input, shape index: {}]
  %s3 = inlined_call_operand.vmem [shape: f32[128,1], index: 3, kind: input, shape index: {}]
  %s4 = inlined_call_operand.vmem [shape: bf16[128,128], index: 4, kind: output, shape index: {}]
  %s5 = sld [smem:[#allocation0]]
  $region38: #{gcn_forward.5} parent=0
    _
  %s7 = ssub.s32 1, %s5
  %s8 = scalar_select 0, %s7, %s5
  // Predicated region
  $region2: #{gcn_forward.5} parent=0 // pred_check
    _
  $region3: #{gcn_forward.5} parent=0 // pred_check_branch
    %10 = sbr.rel (0) target = $region5
  $region4: #{gcn_forward.5} parent=0 // pred_region
    _
  $region5: #{gcn_forward.5} parent=0 // pred_fallthru
    _
  // Predicated region
  $region6: #{gcn_forward.5} parent=0 // pred_check
    _
  $region7: #{gcn_forward.5} parent=0 // pred_check_branch
    %12 = sbr.rel (0) target = $region9
  $region8: #{gcn_forward.5} parent=0 // pred_region
    _
  $region9: #{gcn_forward.5} parent=0 // pred_fallthru
    _
  // Predicated region
  $region10: #{gcn_forward.5} parent=0 // pred_check
    _
  $region11: #{gcn_forward.5} parent=0 // pred_check_branch
    %14 = sbr.rel (0) target = $region13
  $region12: #{gcn_forward.5} parent=0 // pred_region
    _
  $region13: #{gcn_forward.5} parent=0 // pred_fallthru
    _
  // Predicated region
  $region14: #{gcn_forward.5} parent=0 // pred_check
    _
  $region15: #{gcn_forward.5} parent=0 // pred_check_branch
    %16 = sbr.rel (0) target = $region17
  $region16: #{gcn_forward.5} parent=0 // pred_region
    _
  $region17: #{gcn_forward.5} parent=0 // pred_fallthru
    _
  %s18 = smul.u32 0, 128
  %s19 = sshra.s32 %s18, 3
  %s20 = sand.u32 %s18, 7
  %s21 = smul.addr %s19, 4
  %s22 = scalar_lea.vmem %s1, %s21
  %v23 = vld [vmem:[%s22] sm:$0xf]
  %v24 = vld [vmem:[%s22 + $0x4] sm:$0xf]
  %v25 = vld [vmem:[%s22 + $0x8] sm:$0xf]
  %v26 = vld [vmem:[%s22 + $0xc] sm:$0xf]
  %v27 = vld [vmem:[%s22 + $0x10] sm:$0xf]
  %v28 = vld [vmem:[%s22 + $0x14] sm:$0xf]
  %v29 = vld [vmem:[%s22 + $0x18] sm:$0xf]
  %v30 = vld [vmem:[%s22 + $0x1c] sm:$0xf]
  %v31 = vld [vmem:[%s22 + $0x20] sm:$0xf]
  %v32 = vld [vmem:[%s22 + $0x24] sm:$0xf]
  %v33 = vld [vmem:[%s22 + $0x28] sm:$0xf]
  %v34 = vld [vmem:[%s22 + $0x2c] sm:$0xf]
  %v35 = vld [vmem:[%s22 + $0x30] sm:$0xf]
  %v36 = vld [vmem:[%s22 + $0x34] sm:$0xf]
  %v37 = vld [vmem:[%s22 + $0x38] sm:$0xf]
  %v38 = vld [vmem:[%s22 + $0x3c] sm:$0xf]
  %v39 = vld [vmem:[%s0] sm:$0xff]
  %v40 = vld [vmem:[%s0 + $0x8] sm:$0xff]
  %v41 = vld [vmem:[%s0 + $0x10] sm:$0xff]
  %v42 = vld [vmem:[%s0 + $0x18] sm:$0xff]
  %v43 = vunpack.c.l.s8.bf16 %v39
  %v44 = vunpack.c.h.s8.bf16 %v39
  %v45 = vunpack.c.l.s8.bf16 %v40
  %v46 = vunpack.c.h.s8.bf16 %v40
  %v47 = vunpack.c.l.s8.bf16 %v41
  %v48 = vunpack.c.h.s8.bf16 %v41
  %v49 = vunpack.c.l.s8.bf16 %v42
  %v50 = vunpack.c.h.s8.bf16 %v42
  %v67 = vunpack.c.l.b16 %v23
  %v68 = vunpack.c.l.b16 %v24
  %v69 = vunpack.c.l.b16 %v25
  %v70 = vunpack.c.l.b16 %v26
  %v71 = vunpack.c.l.b16 %v27
  %v72 = vunpack.c.l.b16 %v28
  %v73 = vunpack.c.l.b16 %v29
  %v74 = vunpack.c.l.b16 %v30
  %v75 = vunpack.c.l.b16 %v31
  %v76 = vunpack.c.l.b16 %v32
  %v77 = vunpack.c.l.b16 %v33
  %v78 = vunpack.c.l.b16 %v34
  %v79 = vunpack.c.l.b16 %v35
  %v80 = vunpack.c.l.b16 %v36
  %v81 = vunpack.c.l.b16 %v37
  %v82 = vunpack.c.l.b16 %v38
  %v83 = vpack.c.b16 %v68, %v67
  %v84 = vpack.c.b16 %v70, %v69
  %v85 = vpack.c.b16 %v72, %v71
  %v86 = vpack.c.b16 %v74, %v73
  %v87 = vpack.c.b16 %v76, %v75
  %v88 = vpack.c.b16 %v78, %v77
  %v89 = vpack.c.b16 %v80, %v79
  %v90 = vpack.c.b16 %v82, %v81
  %99 = vmatprep.subr.bf16.mxu0 0
  %100 = vmatpush1.bf16.msra.mxu0 %v83
  %101 = vmatprep.subr.bf16.mxu0 0
  %102 = vmatpush1.bf16.msra.mxu0 %v84
  %103 = vmatprep.subr.bf16.mxu0 0
  %104 = vmatpush1.bf16.msra.mxu0 %v85
  %105 = vmatprep.subr.bf16.mxu0 0
  %106 = vmatpush1.bf16.msra.mxu0 %v86
  %107 = vmatprep.subr.bf16.mxu0 0
  %108 = vmatpush1.bf16.msra.mxu0 %v87
  %109 = vmatprep.subr.bf16.mxu0 0
  %110 = vmatpush1.bf16.msra.mxu0 %v88
  %111 = vmatprep.subr.bf16.mxu0 0
  %112 = vmatpush1.bf16.msra.mxu0 %v89
  %113 = vmatprep.subr.bf16.mxu0 0
  %114 = vmatpush1.bf16.msra.mxu0 %v90
  %115 = vmatprep.subr.bf16.mxu0 0
  %116 = vmatpush1.bf16.msra.mxu0 0
  %117 = vmatprep.subr.bf16.mxu0 0
  %118 = vmatpush1.bf16.msra.mxu0 0
  %119 = vmatprep.subr.bf16.mxu0 0
  %120 = vmatpush1.bf16.msra.mxu0 0
  %121 = vmatprep.subr.bf16.mxu0 0
  %122 = vmatpush1.bf16.msra.mxu0 0
  %123 = vmatprep.subr.bf16.mxu0 0
  %124 = vmatpush1.bf16.msra.mxu0 0
  %125 = vmatprep.subr.bf16.mxu0 0
  %126 = vmatpush1.bf16.msra.mxu0 0
  %127 = vmatprep.subr.bf16.mxu0 0
  %128 = vmatpush1.bf16.msra.mxu0 0
  %129 = vmatprep.subr.bf16.mxu0 0
  %130 = vmatpush1.bf16.msra.mxu0 0
  %131 = vmatprep.mubr.bf16.mxu0 0
  %132 = vmatmul.mubr.bf16.gmra.mrb[0].mxu0 %v43
  %v133 = vpop.f32.mrb[0].mxu0
  %v134 = vadd.f32 0.0, %v133
  %v135 = vpop.f32.mrb[0].mxu0
  %v136 = vpop.f32.mrb[0].mxu0
  %v137 = vadd.f32 0.0, %v136
  %v138 = vpop.f32.mrb[0].mxu0
  %139 = vmatprep.mubr.bf16.mxu0 0
  %140 = vmatmul.mubr.bf16.gmra.mrb[0].mxu0 %v44
  %v141 = vpop.f32.mrb[0].mxu0
  %v142 = vadd.f32 0.0, %v141
  %v143 = vpop.f32.mrb[0].mxu0
  %v144 = vpop.f32.mrb[0].mxu0
  %v145 = vadd.f32 0.0, %v144
  %v146 = vpop.f32.mrb[0].mxu0
  %147 = vmatprep.mubr.bf16.mxu0 0
  %148 = vmatmul.mubr.bf16.gmra.mrb[0].mxu0 %v45
  %v149 = vpop.f32.mrb[0].mxu0
  %v150 = vadd.f32 0.0, %v149
  %v151 = vpop.f32.mrb[0].mxu0
  %v152 = vpop.f32.mrb[0].mxu0
  %v153 = vadd.f32 0.0, %v152
  %v154 = vpop.f32.mrb[0].mxu0
  %155 = vmatprep.mubr.bf16.mxu0 0
  %156 = vmatmul.mubr.bf16.gmra.mrb[0].mxu0 %v46
  %v157 = vpop.f32.mrb[0].mxu0
  %v158 = vadd.f32 0.0, %v157
  %v159 = vpop.f32.mrb[0].mxu0
  %v160 = vpop.f32.mrb[0].mxu0
  %v161 = vadd.f32 0.0, %v160
  %v162 = vpop.f32.mrb[0].mxu0
  %163 = vmatprep.mubr.bf16.mxu0 0
  %164 = vmatmul.mubr.bf16.gmra.mrb[0].mxu0 %v47
  %v165 = vpop.f32.mrb[0].mxu0
  %v166 = vadd.f32 0.0, %v165
  %v167 = vpop.f32.mrb[0].mxu0
  %v168 = vpop.f32.mrb[0].mxu0
  %v169 = vadd.f32 0.0, %v168
  %v170 = vpop.f32.mrb[0].mxu0
  %171 = vmatprep.mubr.bf16.mxu0 0
  %172 = vmatmul.mubr.bf16.gmra.mrb[0].mxu0 %v48
  %v173 = vpop.f32.mrb[0].mxu0
  %v174 = vadd.f32 0.0, %v173
  %v175 = vpop.f32.mrb[0].mxu0
  %v176 = vpop.f32.mrb[0].mxu0
  %v177 = vadd.f32 0.0, %v176
  %v178 = vpop.f32.mrb[0].mxu0
  %179 = vmatprep.mubr.bf16.mxu0 0
  %180 = vmatmul.mubr.bf16.gmra.mrb[0].mxu0 %v49
  %v181 = vpop.f32.mrb[0].mxu0
  %v182 = vadd.f32 0.0, %v181
  %v183 = vpop.f32.mrb[0].mxu0
  %v184 = vpop.f32.mrb[0].mxu0
  %v185 = vadd.f32 0.0, %v184
  %v186 = vpop.f32.mrb[0].mxu0
  %187 = vmatprep.mubr.bf16.mxu0 0
  %188 = vmatmul.mubr.bf16.gmra.mrb[0].mxu0 %v50
  %v189 = vpop.f32.mrb[0].mxu0
  %v190 = vadd.f32 0.0, %v189
  %v191 = vpop.f32.mrb[0].mxu0
  %v192 = vpop.f32.mrb[0].mxu0
  %v193 = vadd.f32 0.0, %v192
  %v194 = vpop.f32.mrb[0].mxu0
  %195 = vdwg.mxu0
  %p196 = scmp.eq.s32.totalorder 0, 0
  // Predicated region
  $region18: #{gcn_forward.5} parent=0 // pred_check
    %p197 = pneg %p196
  $region19: #{gcn_forward.5} parent=0 // pred_check_branch
    %199 = sbr.rel (%p197) target = $region21
  $region20: #{gcn_forward.5} parent=0 // pred_region
    %200 = vst [vmem:[#allocation2] sm:$0xff] %v134
    %201 = vst [vmem:[#allocation2 + $0x8] sm:$0xff] %v137
    %202 = vst [vmem:[#allocation2 + $0x10] sm:$0xff] %v142
    %203 = vst [vmem:[#allocation2 + $0x18] sm:$0xff] %v145
    %204 = vst [vmem:[#allocation2 + $0x20] sm:$0xff] %v150
    %205 = vst [vmem:[#allocation2 + $0x28] sm:$0xff] %v153
    %206 = vst [vmem:[#allocation2 + $0x30] sm:$0xff] %v158
    %207 = vst [vmem:[#allocation2 + $0x38] sm:$0xff] %v161
    %208 = vst [vmem:[#allocation2 + $0x40] sm:$0xff] %v166
    %209 = vst [vmem:[#allocation2 + $0x48] sm:$0xff] %v169
    %210 = vst [vmem:[#allocation2 + $0x50] sm:$0xff] %v174
    %211 = vst [vmem:[#allocation2 + $0x58] sm:$0xff] %v177
    %212 = vst [vmem:[#allocation2 + $0x60] sm:$0xff] %v182
    %213 = vst [vmem:[#allocation2 + $0x68] sm:$0xff] %v185
    %214 = vst [vmem:[#allocation2 + $0x70] sm:$0xff] %v190
    %215 = vst [vmem:[#allocation2 + $0x78] sm:$0xff] %v193
  $region21: #{gcn_forward.5} parent=0 // pred_fallthru
    _
  %p216 = scmp.ne.s32.totalorder 0, 0
  // Predicated region
  $region22: #{gcn_forward.5} parent=0 // pred_check
    %p217 = pneg %p216
  $region23: #{gcn_forward.5} parent=0 // pred_check_branch
    %219 = sbr.rel (%p217) target = $region25
  $region24: #{gcn_forward.5} parent=0 // pred_region
    %v220 = vld [vmem:[#allocation2] sm:$0xff]
    %v221 = vld [vmem:[#allocation2 + $0x8] sm:$0xff]
    %v222 = vld [vmem:[#allocation2 + $0x10] sm:$0xff]
    %v223 = vld [vmem:[#allocation2 + $0x18] sm:$0xff]
    %v224 = vld [vmem:[#allocation2 + $0x20] sm:$0xff]
    %v225 = vld [vmem:[#allocation2 + $0x28] sm:$0xff]
    %v226 = vld [vmem:[#allocation2 + $0x30] sm:$0xff]
    %v227 = vld [vmem:[#allocation2 + $0x38] sm:$0xff]
    %v228 = vld [vmem:[#allocation2 + $0x40] sm:$0xff]
    %v229 = vld [vmem:[#allocation2 + $0x48] sm:$0xff]
    %v230 = vld [vmem:[#allocation2 + $0x50] sm:$0xff]
    %v231 = vld [vmem:[#allocation2 + $0x58] sm:$0xff]
    %v232 = vld [vmem:[#allocation2 + $0x60] sm:$0xff]
    %v233 = vld [vmem:[#allocation2 + $0x68] sm:$0xff]
    %v234 = vld [vmem:[#allocation2 + $0x70] sm:$0xff]
    %v235 = vld [vmem:[#allocation2 + $0x78] sm:$0xff]
    %v236 = vadd.f32 %v220, %v134
    %v237 = vadd.f32 %v221, %v137
    %v238 = vadd.f32 %v222, %v142
    %v239 = vadd.f32 %v223, %v145
    %v240 = vadd.f32 %v224, %v150
    %v241 = vadd.f32 %v225, %v153
    %v242 = vadd.f32 %v226, %v158
    %v243 = vadd.f32 %v227, %v161
    %v244 = vadd.f32 %v228, %v166
    %v245 = vadd.f32 %v229, %v169
    %v246 = vadd.f32 %v230, %v174
    %v247 = vadd.f32 %v231, %v177
    %v248 = vadd.f32 %v232, %v182
    %v249 = vadd.f32 %v233, %v185
    %v250 = vadd.f32 %v234, %v190
    %v251 = vadd.f32 %v235, %v193
    %252 = vst [vmem:[#allocation2] sm:$0xff] %v236
    %253 = vst [vmem:[#allocation2 + $0x8] sm:$0xff] %v237
    %254 = vst [vmem:[#allocation2 + $0x10] sm:$0xff] %v238
    %255 = vst [vmem:[#allocation2 + $0x18] sm:$0xff] %v239
    %256 = vst [vmem:[#allocation2 + $0x20] sm:$0xff] %v240
    %257 = vst [vmem:[#allocation2 + $0x28] sm:$0xff] %v241
    %258 = vst [vmem:[#allocation2 + $0x30] sm:$0xff] %v242
    %259 = vst [vmem:[#allocation2 + $0x38] sm:$0xff] %v243
    %260 = vst [vmem:[#allocation2 + $0x40] sm:$0xff] %v244
    %261 = vst [vmem:[#allocation2 + $0x48] sm:$0xff] %v245
    %262 = vst [vmem:[#allocation2 + $0x50] sm:$0xff] %v246
    %263 = vst [vmem:[#allocation2 + $0x58] sm:$0xff] %v247
    %264 = vst [vmem:[#allocation2 + $0x60] sm:$0xff] %v248
    %265 = vst [vmem:[#allocation2 + $0x68] sm:$0xff] %v249
    %266 = vst [vmem:[#allocation2 + $0x70] sm:$0xff] %v250
    %267 = vst [vmem:[#allocation2 + $0x78] sm:$0xff] %v251
  $region25: #{gcn_forward.5} parent=0 // pred_fallthru
    _
  // Predicated region
  $region26: #{gcn_forward.5} parent=0 // pred_check
    %p268 = pneg %p196
  $region27: #{gcn_forward.5} parent=0 // pred_check_branch
    %270 = sbr.rel (%p268) target = $region29
  $region28: #{gcn_forward.5} parent=0 // pred_region
    %v271 = vld [vmem:[#allocation2] sm:$0xff]
    %v272 = vld [vmem:[#allocation2 + $0x8] sm:$0xff]
    %v273 = vld [vmem:[#allocation2 + $0x10] sm:$0xff]
    %v274 = vld [vmem:[#allocation2 + $0x18] sm:$0xff]
    %v275 = vld [vmem:[#allocation2 + $0x20] sm:$0xff]
    %v276 = vld [vmem:[#allocation2 + $0x28] sm:$0xff]
    %v277 = vld [vmem:[#allocation2 + $0x30] sm:$0xff]
    %v278 = vld [vmem:[#allocation2 + $0x38] sm:$0xff]
    %v279 = vld [vmem:[#allocation2 + $0x40] sm:$0xff]
    %v280 = vld [vmem:[#allocation2 + $0x48] sm:$0xff]
    %v281 = vld [vmem:[#allocation2 + $0x50] sm:$0xff]
    %v282 = vld [vmem:[#allocation2 + $0x58] sm:$0xff]
    %v283 = vld [vmem:[#allocation2 + $0x60] sm:$0xff]
    %v284 = vld [vmem:[#allocation2 + $0x68] sm:$0xff]
    %v285 = vld [vmem:[#allocation2 + $0x70] sm:$0xff]
    %v286 = vld [vmem:[#allocation2 + $0x78] sm:$0xff]
    %v287 = vld [vmem:[%s3] sm:$0xff]
    %v288 = vld [vmem:[%s3 + $0x8] sm:$0xff]
    %v289 = vld [vmem:[%s3 + $0x10] sm:$0xff]
    %v290 = vld [vmem:[%s3 + $0x18] sm:$0xff]
    %v291 = vld [vmem:[%s3 + $0x20] sm:$0xff]
    %v292 = vld [vmem:[%s3 + $0x28] sm:$0xff]
    %v293 = vld [vmem:[%s3 + $0x30] sm:$0xff]
    %v294 = vld [vmem:[%s3 + $0x38] sm:$0xff]
    %v295 = vld [vmem:[%s3 + $0x40] sm:$0xff]
    %v296 = vld [vmem:[%s3 + $0x48] sm:$0xff]
    %v297 = vld [vmem:[%s3 + $0x50] sm:$0xff]
    %v298 = vld [vmem:[%s3 + $0x58] sm:$0xff]
    %v299 = vld [vmem:[%s3 + $0x60] sm:$0xff]
    %v300 = vld [vmem:[%s3 + $0x68] sm:$0xff]
    %v301 = vld [vmem:[%s3 + $0x70] sm:$0xff]
    %v302 = vld [vmem:[%s3 + $0x78] sm:$0xff]
    %304 = vset.pattern.permute.xlu0 0
    %305 = vperm.xlu0 %304, %v287
    %v306 = vpop.permute.xlu0 %305
    %309 = vset.pattern.permute.xlu0 0
    %310 = vperm.xlu0 %309, %v288
    %v311 = vpop.permute.xlu0 %310
    %314 = vset.pattern.permute.xlu0 0
    %315 = vperm.xlu0 %314, %v289
    %v316 = vpop.permute.xlu0 %315
    %319 = vset.pattern.permute.xlu0 0
    %320 = vperm.xlu0 %319, %v290
    %v321 = vpop.permute.xlu0 %320
    %324 = vset.pattern.permute.xlu0 0
    %325 = vperm.xlu0 %324, %v291
    %v326 = vpop.permute.xlu0 %325
    %329 = vset.pattern.permute.xlu0 0
    %330 = vperm.xlu0 %329, %v292
    %v331 = vpop.permute.xlu0 %330
    %334 = vset.pattern.permute.xlu0 0
    %335 = vperm.xlu0 %334, %v293
    %v336 = vpop.permute.xlu0 %335
    %339 = vset.pattern.permute.xlu0 0
    %340 = vperm.xlu0 %339, %v294
    %v341 = vpop.permute.xlu0 %340
    %344 = vset.pattern.permute.xlu0 0
    %345 = vperm.xlu0 %344, %v295
    %v346 = vpop.permute.xlu0 %345
    %349 = vset.pattern.permute.xlu0 0
    %350 = vperm.xlu0 %349, %v296
    %v351 = vpop.permute.xlu0 %350
    %354 = vset.pattern.permute.xlu0 0
    %355 = vperm.xlu0 %354, %v297
    %v356 = vpop.permute.xlu0 %355
    %359 = vset.pattern.permute.xlu0 0
    %360 = vperm.xlu0 %359, %v298
    %v361 = vpop.permute.xlu0 %360
    %364 = vset.pattern.permute.xlu0 0
    %365 = vperm.xlu0 %364, %v299
    %v366 = vpop.permute.xlu0 %365
    %369 = vset.pattern.permute.xlu0 0
    %370 = vperm.xlu0 %369, %v300
    %v371 = vpop.permute.xlu0 %370
    %374 = vset.pattern.permute.xlu0 0
    %375 = vperm.xlu0 %374, %v301
    %v376 = vpop.permute.xlu0 %375
    %379 = vset.pattern.permute.xlu0 0
    %380 = vperm.xlu0 %379, %v302
    %v381 = vpop.permute.xlu0 %380
    %v383 = vmul.f32 %v271, %v306
    %v384 = vmul.f32 %v272, %v311
    %v385 = vmul.f32 %v273, %v316
    %v386 = vmul.f32 %v274, %v321
    %v387 = vmul.f32 %v275, %v326
    %v388 = vmul.f32 %v276, %v331
    %v389 = vmul.f32 %v277, %v336
    %v390 = vmul.f32 %v278, %v341
    %v391 = vmul.f32 %v279, %v346
    %v392 = vmul.f32 %v280, %v351
    %v393 = vmul.f32 %v281, %v356
    %v394 = vmul.f32 %v282, %v361
    %v395 = vmul.f32 %v283, %v366
    %v396 = vmul.f32 %v284, %v371
    %v397 = vmul.f32 %v285, %v376
    %v398 = vmul.f32 %v286, %v381
    %v399 = vld [vmem:[%s2] sm:$0x1]
    %v401 = vlaneseq
    %v402 = vshrl.u32 %v401, 7
    %v403 = vsub.s32 0, %v402
    %v404 = vrot.slane %v399, %v403
    %v406 = vadd.f32 %v383, %v404
    %v407 = vadd.f32 %v384, %v404
    %v408 = vadd.f32 %v385, %v404
    %v409 = vadd.f32 %v386, %v404
    %v410 = vadd.f32 %v387, %v404
    %v411 = vadd.f32 %v388, %v404
    %v412 = vadd.f32 %v389, %v404
    %v413 = vadd.f32 %v390, %v404
    %v414 = vadd.f32 %v391, %v404
    %v415 = vadd.f32 %v392, %v404
    %v416 = vadd.f32 %v393, %v404
    %v417 = vadd.f32 %v394, %v404
    %v418 = vadd.f32 %v395, %v404
    %v419 = vadd.f32 %v396, %v404
    %v420 = vadd.f32 %v397, %v404
    %v421 = vadd.f32 %v398, %v404
    %v422 = vmax.f32 %v406, 0.0
    %v423 = vmax.f32 %v407, 0.0
    %v424 = vmax.f32 %v408, 0.0
    %v425 = vmax.f32 %v409, 0.0
    %v426 = vmax.f32 %v410, 0.0
    %v427 = vmax.f32 %v411, 0.0
    %v428 = vmax.f32 %v412, 0.0
    %v429 = vmax.f32 %v413, 0.0
    %v430 = vmax.f32 %v414, 0.0
    %v431 = vmax.f32 %v415, 0.0
    %v432 = vmax.f32 %v416, 0.0
    %v433 = vmax.f32 %v417, 0.0
    %v434 = vmax.f32 %v418, 0.0
    %v435 = vmax.f32 %v419, 0.0
    %v436 = vmax.f32 %v420, 0.0
    %v437 = vmax.f32 %v421, 0.0
    %v438 = vpack.c.bf16 %v423, %v422
    %v439 = vpack.c.bf16 %v425, %v424
    %v440 = vpack.c.bf16 %v427, %v426
    %v441 = vpack.c.bf16 %v429, %v428
    %v442 = vpack.c.bf16 %v431, %v430
    %v443 = vpack.c.bf16 %v433, %v432
    %v444 = vpack.c.bf16 %v435, %v434
    %v445 = vpack.c.bf16 %v437, %v436
    %v454 = vunpack.c.l.b16 %v438
    %v455 = vunpack.c.h.b16 %v438
    %v456 = vunpack.c.l.b16 %v439
    %v457 = vunpack.c.h.b16 %v439
    %v458 = vunpack.c.l.b16 %v440
    %v459 = vunpack.c.h.b16 %v440
    %v460 = vunpack.c.l.b16 %v441
    %v461 = vunpack.c.h.b16 %v441
    %v462 = vunpack.c.l.b16 %v442
    %v463 = vunpack.c.h.b16 %v442
    %v464 = vunpack.c.l.b16 %v443
    %v465 = vunpack.c.h.b16 %v443
    %v466 = vunpack.c.l.b16 %v444
    %v467 = vunpack.c.h.b16 %v444
    %v468 = vunpack.c.l.b16 %v445
    %v469 = vunpack.c.h.b16 %v445
    %v470 = vpack.c.b16 %v454, %v454
    %v471 = vpack.c.b16 %v455, %v455
    %v472 = vpack.c.b16 %v456, %v456
    %v473 = vpack.c.b16 %v457, %v457
    %v474 = vpack.c.b16 %v458, %v458
    %v475 = vpack.c.b16 %v459, %v459
    %v476 = vpack.c.b16 %v460, %v460
    %v477 = vpack.c.b16 %v461, %v461
    %v478 = vpack.c.b16 %v462, %v462
    %v479 = vpack.c.b16 %v463, %v463
    %v480 = vpack.c.b16 %v464, %v464
    %v481 = vpack.c.b16 %v465, %v465
    %v482 = vpack.c.b16 %v466, %v466
    %v483 = vpack.c.b16 %v467, %v467
    %v484 = vpack.c.b16 %v468, %v468
    %v485 = vpack.c.b16 %v469, %v469
    %502 = vst [vmem:[%s4] sm:$0xf] %v470
    %503 = vst [vmem:[%s4 + $0x4] sm:$0xf] %v471
    %504 = vst [vmem:[%s4 + $0x8] sm:$0xf] %v472
    %505 = vst [vmem:[%s4 + $0xc] sm:$0xf] %v473
    %506 = vst [vmem:[%s4 + $0x10] sm:$0xf] %v474
    %507 = vst [vmem:[%s4 + $0x14] sm:$0xf] %v475
    %508 = vst [vmem:[%s4 + $0x18] sm:$0xf] %v476
    %509 = vst [vmem:[%s4 + $0x1c] sm:$0xf] %v477
    %510 = vst [vmem:[%s4 + $0x20] sm:$0xf] %v478
    %511 = vst [vmem:[%s4 + $0x24] sm:$0xf] %v479
    %512 = vst [vmem:[%s4 + $0x28] sm:$0xf] %v480
    %513 = vst [vmem:[%s4 + $0x2c] sm:$0xf] %v481
    %514 = vst [vmem:[%s4 + $0x30] sm:$0xf] %v482
    %515 = vst [vmem:[%s4 + $0x34] sm:$0xf] %v483
    %516 = vst [vmem:[%s4 + $0x38] sm:$0xf] %v484
    %517 = vst [vmem:[%s4 + $0x3c] sm:$0xf] %v485
  $region29: #{gcn_forward.5} parent=0 // pred_fallthru
    _
  // Predicated region
  $region30: #{gcn_forward.5} parent=0 // pred_check
    _
  $region31: #{gcn_forward.5} parent=0 // pred_check_branch
    %519 = sbr.rel (0) target = $region33
  $region32: #{gcn_forward.5} parent=0 // pred_region
    _
  $region33: #{gcn_forward.5} parent=0 // pred_fallthru
    _
  // Predicated region
  $region34: #{gcn_forward.5} parent=0 // pred_check
    _
  $region35: #{gcn_forward.5} parent=0 // pred_check_branch
    %521 = sbr.rel (0) target = $region37
  $region36: #{gcn_forward.5} parent=0 // pred_region
    _
  $region37: #{gcn_forward.5} parent=0 // pred_fallthru
    _

</llo_original>
